<compile_context>
chip_gen: v7x
topology: tpu7x:2x2x1
jax: 0.10.0
libtpu: 0.0.40
codegen_flags: <defaults>
</compile_context>

<pallas_src>
import math
from functools import partial

import jax
import jax.numpy as jnp
from jax import lax
from jax.experimental import pallas as pl
from jax.experimental.pallas import tpu as pltpu


LANE = 128
_VMEM = pltpu.MemorySpace.VMEM


def _round_up(n, m):
    return (n + m - 1) // m * m


# ----------------------------- Pallas kernel ------------------------------- #

def _xil_prec_kernel(xit_ref, lp_ref, rhs_ref, out_ref, *, f, fan_in):
    """One fused MXU pass + prior-precision diagonal fold.

    out = (Xi^T * exp(log_prec)) @ [Xi | u^T | 0]   then   out[:, :F] += fan_in * I_F

    xit_ref : (F, I)  Xi transposed — LHS contracts over its last (lane) dim.
    lp_ref  : (1, I)  log-precision row, broadcast across the F sublanes.
    rhs_ref : (I, P)  [Xi | u^T] zero-padded to P = multiple of 128 lanes.
    out_ref : (F, P)  lane-dense slab [prec | XiLY | 0].
    """
    xil = xit_ref[...] * jnp.exp(lp_ref[...])                  # EUP exp + VPU mul, (F, I)
    slab = jnp.dot(xil, rhs_ref[...],
                   preferred_element_type=jnp.float32)         # single MXU matmul (F, P)
    # Fold NealPrior precision (fan_in * I_F) onto the diagonal of the XiLXi block.
    rows = lax.broadcasted_iota(jnp.int32, slab.shape, 0)
    cols = lax.broadcasted_iota(jnp.int32, slab.shape, 1)
    on_diag = (rows == cols) & (cols < f)
    out_ref[...] = jnp.where(on_diag, slab + fan_in, slab)     # VPU select, free under MXU


def _compute_prec_xly(xi, log_prec_row, u, fan_in):
    """Return prec = XiLXi + fan_in*I (F, F) and XiLY (F, O) via one fused,
    lane-dense, gridless Pallas matmul."""
    I, F = xi.shape
    O = u.shape[0]
    assert xi.shape == (I, F) and u.shape == (O, I) and log_prec_row.shape == (1, I)
    P = _round_up(F + O, LANE)                       # lane-dense output slab width

    xi_t = xi.T                                      # (F, I): contract over LHS lanes
    rhs = jnp.concatenate(                           # (I, P) = [Xi | u^T | 0]
        [xi, u.T, jnp.zeros((I, P - F - O), jnp.float32)], axis=1)

    slab = pl.pallas_call(
        partial(_xil_prec_kernel, f=F, fan_in=float(fan_in)),
        out_shape=jax.ShapeDtypeStruct((F, P), jnp.float32),
        # Gridless call: whole arrays live in VMEM, no pipeline step overhead.
        in_specs=[pl.BlockSpec(memory_space=_VMEM),   # xi_t  (F, I)
                  pl.BlockSpec(memory_space=_VMEM),   # lp    (1, I)
                  pl.BlockSpec(memory_space=_VMEM)],  # rhs   (I, P)
        out_specs=pl.BlockSpec(memory_space=_VMEM),   # slab  (F, P)
        cost_estimate=pl.CostEstimate(
            flops=2 * F * I * P,
            transcendentals=I,
            bytes_accessed=4 * (F * I + I + I * P + F * P)),
    )(xi_t, log_prec_row, rhs)

    return slab[:, :F], slab[:, F:F + O]


# ------------------------------- forward glue ------------------------------ #

def li_conv2d_weights_forward(params, x, rng_key, *, in_channels, out_channels,
                              kernel_size, log_prec_lr=1.0):
    """Mirrors LIConv2dWeights.forward (first call, _sample is None)."""
    S = x.shape[0]                              # only the sample count of the input is used
    F = in_channels * kernel_size ** 2          # in_features
    I = F                                       # inducing_batch
    O = out_channels
    fan_in = float(F)                           # NealPrior: precision = fan-in * Identity

    xi = params["Xi"][0].astype(jnp.float32)                        # (I, F)
    u = params["u"][:, :, 0].astype(jnp.float32)                    # (O, I)
    log_prec = (log_prec_lr * params["log_prec_scaled"])[0, 0]      # (I,)
    log_prec_row = log_prec.astype(jnp.float32)[None, :]            # (1, I)

    # ---- Pallas kernel: fused [prec | XiLY] matmul slab (prior diag folded in) ----
    prec, xly = _compute_prec_xly(xi, log_prec_row, u, fan_in)      # (F,F), (F,O)

    L = jnp.linalg.cholesky(prec)                                   # (F, F), lower
    logdet_prec_one = 2.0 * jnp.sum(jnp.log(jnp.diagonal(L)))       # scalar
    logdet_prec = O * logdet_prec_one                               # expand(S, O).sum(-1)

    # mean = cholesky_solve(XiLY, L)  -> (F, O)
    mean = jax.scipy.linalg.cho_solve((L, True), xly)               # (F, O)
    mean_of = mean.T                                                # (O, F)

    # Z ~ N(0, 1), shape (S, O, F[, 1]);  dW solves L^T dW = Z
    Z = jax.random.normal(rng_key, (S, O, F), dtype=jnp.float32)
    Z_cols = Z.reshape(S * O, F).T                                  # (F, S*O)
    dW_cols = jax.scipy.linalg.solve_triangular(L, Z_cols, lower=True, trans='T')
    dW = dW_cols.T.reshape(S, O, F)

    # Sample assembly + per-sample reductions: left to XLA fusion (tiny S*O*F arrays;
    # a dedicated pallas_call costs more in launch/DMA overhead than the compute).
    sample = mean_of[None] + dW                                     # (S, O, F)
    ssq = jnp.sum(sample * sample, axis=(1, 2))                     # (S,)
    zsq = jnp.sum(Z * Z, axis=(1, 2))                               # (S,)

    # logP = mvnormal_log_prob_unnorm(prior_prec, sample^T)
    #      = -0.5 * fan_in * sum(sample^2) + 0.5 * O * logdet(fan_in * I_F)
    logP = -0.5 * fan_in * ssq + 0.5 * O * F * math.log(fan_in)
    logQ = -0.5 * zsq + 0.5 * logdet_prec
    logpq = logP - logQ

    return sample, logpq


# ---------------------------------- main ----------------------------------- #

if __name__ == "__main__":
    in_channels, out_channels, kernel_size = 4, 8, 3
    F = in_channels * kernel_size ** 2   # 36
    I = F                                # inducing_batch
    S = 2                                # number of samples (taken from input's dim 0)
    log_prec_init, log_prec_lr = -4.0, 1.0

    key = jax.random.PRNGKey(0)
    k_u, k_xi, k_z, k_in = jax.random.split(key, 4)

    params = {
        "u": jax.random.normal(k_u, (out_channels, I, 1), dtype=jnp.float32),
        "Xi": jax.random.normal(k_xi, (1, I, F), dtype=jnp.float32),
        "log_prec_scaled": (log_prec_init / log_prec_lr)
                           * jnp.ones((1, 1, I), dtype=jnp.float32),
    }

    # forward's input: only its leading (sample) dimension is used by the module
    x = jax.random.normal(k_in, (S, I, F), dtype=jnp.float32)

    fwd = jax.jit(partial(li_conv2d_weights_forward,
                          in_channels=in_channels, out_channels=out_channels,
                          kernel_size=kernel_size, log_prec_lr=log_prec_lr))
    sample, logpq = fwd(params, x, k_z)
    jax.block_until_ready((sample, logpq))

    assert sample.shape == (S, out_channels, F)
    assert logpq.shape == (S,)
    assert bool(jnp.all(jnp.isfinite(sample))) and bool(jnp.all(jnp.isfinite(logpq)))
    print("KERNEL_OK")
</pallas_src>

<mosaic_0001>
module attributes {stable_mosaic.version = 11 : i64} {
  func.func @_xil_prec_kernel(%arg0: memref<36x36xf32, #tpu.memory_space<vmem>>, %arg1: memref<1x36xf32, #tpu.memory_space<vmem>>, %arg2: memref<36x128xf32, #tpu.memory_space<vmem>>, %arg3: memref<36x128xf32, #tpu.memory_space<vmem>>) attributes {dimension_semantics = [], scalar_prefetch = 0 : i64, scratch_operands = 0 : i64, tpu.core_type = #tpu.core_type<tc>} {
    %c0 = arith.constant 0 : index
    %c0_0 = arith.constant 0 : index
    %0 = vector.load %arg0[%c0, %c0_0] : memref<36x36xf32, #tpu.memory_space<vmem>>, vector<36x36xf32>
    %c0_1 = arith.constant 0 : index
    %c0_2 = arith.constant 0 : index
    %1 = vector.load %arg1[%c0_1, %c0_2] : memref<1x36xf32, #tpu.memory_space<vmem>>, vector<1x36xf32>
    %2 = math.exp %1 : vector<1x36xf32>
    %3 = vector.broadcast %2 : vector<1x36xf32> to vector<36x36xf32>
    %4 = arith.mulf %0, %3 : vector<36x36xf32>
    %c0_3 = arith.constant 0 : index
    %c0_4 = arith.constant 0 : index
    %5 = vector.load %arg2[%c0_3, %c0_4] : memref<36x128xf32, #tpu.memory_space<vmem>>, vector<36x128xf32>
    %cst = arith.constant dense<0.000000e+00> : vector<36x128xf32>
    %6 = tpu.matmul %4, %5, %cst {dimension_numbers = #tpu.dot_dimension_numbers<[1], [0], [0], [1], [0, 0, 1, 1], [], []>} : vector<36x36xf32>, vector<36x128xf32>, vector<36x128xf32> -> vector<36x128xf32>
    %7 = tpu.iota {dimensions = array<i32: 0>} : vector<36x128xi32>
    %8 = tpu.iota {dimensions = array<i32: 1>} : vector<36x128xi32>
    %9 = arith.cmpi eq, %7, %8 : vector<36x128xi32>
    %c36_i32 = arith.constant 36 : i32
    %10 = vector.broadcast %c36_i32 : i32 to vector<36x128xi32>
    %11 = arith.cmpi slt, %8, %10 : vector<36x128xi32>
    %12 = arith.andi %9, %11 : vector<36x128xi1>
    %cst_5 = arith.constant 3.600000e+01 : f32
    %13 = vector.broadcast %cst_5 : f32 to vector<36x128xf32>
    %14 = arith.addf %6, %13 : vector<36x128xf32>
    %15 = arith.select %12, %14, %6 : vector<36x128xi1>, vector<36x128xf32>
    %c0_6 = arith.constant 0 : index
    %c0_7 = arith.constant 0 : index
    %16 = vector.load %arg3[%c0_6, %c0_7] : memref<36x128xf32, #tpu.memory_space<vmem>>, vector<36x128xf32>
    tpu.vector_store %arg3[%c0_6, %c0_7], %15 {strides = array<i32>} : memref<36x128xf32, #tpu.memory_space<vmem>>, vector<36x128xf32>,
    return
  }
}

</mosaic_0001>

<llo_original>
// kernel: custom-call.8
$region0: #{custom-call.8}
  %s0 = inlined_call_operand.vmem [shape: f32[36,36], index: 0, kind: input, shape index: {}]
  %s1 = inlined_call_operand.vmem [shape: f32[36,36], index: 1, kind: output, shape index: {}]
  $region1: #{custom-call.8} parent=0
    #allocation0 [shape = 'u8[20480]{0}', space=vmem, size = 0x5000, scoped, tag = 'operand span for operand 0']
    #allocation1 [shape = 'u8[20480]{0}', space=vmem, size = 0x5000, scoped, tag = 'operand span for operand 1']
    // Predicated region
    $region2: #{custom-call.8} parent=1 // pred_check
      _
    $region3: #{custom-call.8} parent=1 // pred_check_branch
      %3 = sbr.rel (0) target = $region5
    $region4: #{custom-call.8} parent=1 // pred_region
      // Predicated region
      $region6: #{custom-call.8} parent=4 // pred_check
        _
      $region7: #{custom-call.8} parent=4 // pred_check_branch
        %5 = sbr.rel (0) target = $region9
      $region8: #{custom-call.8} parent=4 // pred_region
        // Predicated region
        $region21: #{custom-call.8} parent=8 // pred_check
          _
        $region22: #{custom-call.8} parent=8 // pred_check_branch
          %28 = sbr.rel (0) target = $region24
        $region23: #{custom-call.8} parent=8 // pred_region
          loop: start=0, step=1, limit=1
          $region25: #{custom-call.8} parent=23 // loop_pre_header
            _
          $region26: #{custom-call.8} parent=23 // loop_header
            %s30 = sphi 0, %s34
            %p31 = scmp.ge.s32.totalorder %s30, 1
            %s35 = sphi %s0, %s0
            %s36 = sphi [#allocation0], [#allocation0]
          $region27: #{custom-call.8} parent=23 // loop_header_branch
            %33 = sbr.rel (%p31) target = $region31
          $region28: #{custom-call.8} parent=23 // loop_body
            %v37 = vld [vmem:[%s35] sm:$0xff]
            %38 = vst [vmem:[%s36] sm:$0xff] %v37
            %v39 = vld [vmem:[%s35 + $0x8] sm:$0xff]
            %40 = vst [vmem:[%s36 + $0x8] sm:$0xff] %v39
            %v41 = vld [vmem:[%s35 + $0x10] sm:$0xff]
            %42 = vst [vmem:[%s36 + $0x10] sm:$0xff] %v41
            %v43 = vld [vmem:[%s35 + $0x18] sm:$0xff]
            %44 = vst [vmem:[%s36 + $0x18] sm:$0xff] %v43
            %v45 = vld [vmem:[%s35 + $0x20] sm:$0xff]
            %46 = vst [vmem:[%s36 + $0x20] sm:$0xff] %v45
          $region29: #{custom-call.8} parent=23 // loop_footer
            %s34 = sadd.s32 1, %s30
          $region30: #{custom-call.8} parent=23 // loop_footer_branch
            %29 = sbr.rel target = $region26
          $region31: #{custom-call.8} parent=23 // loop_exit
            _
        $region24: #{custom-call.8} parent=8 // pred_fallthru
          _
        // Predicated region
        $region32: #{custom-call.8} parent=8 // pred_check
          _
        $region33: #{custom-call.8} parent=8 // pred_check_branch
          %48 = sbr.rel target = $region35
        $region34: #{custom-call.8} parent=8 // pred_region
          _
        $region35: #{custom-call.8} parent=8 // pred_fallthru
          _
      $region9: #{custom-call.8} parent=4 // pred_fallthru
        _
      // Predicated region
      $region10: #{custom-call.8} parent=4 // pred_check
        _
      $region11: #{custom-call.8} parent=4 // pred_check_branch
        %7 = sbr.rel target = $region13
      $region12: #{custom-call.8} parent=4 // pred_region
        loop: start=0, step=1, limit=1
        $region14: #{custom-call.8} parent=12 // loop_pre_header
          _
        $region15: #{custom-call.8} parent=12 // loop_header
          %s10 = sphi 0, %s14
          %p11 = scmp.ge.s32.totalorder %s10, 1
          %s15 = sphi %s0, %s0
          %s16 = sphi [#allocation0], [#allocation0]
        $region16: #{custom-call.8} parent=12 // loop_header_branch
          %13 = sbr.rel (%p11) target = $region20
        $region17: #{custom-call.8} parent=12 // loop_body
          %v17 = vld [vmem:[%s15] sm:$0xff]
          %18 = vst [vmem:[%s16] sm:$0xff] %v17
          %v19 = vld [vmem:[%s15 + $0x8] sm:$0xff]
          %20 = vst [vmem:[%s16 + $0x8] sm:$0xff] %v19
          %v21 = vld [vmem:[%s15 + $0x10] sm:$0xff]
          %22 = vst [vmem:[%s16 + $0x10] sm:$0xff] %v21
          %v23 = vld [vmem:[%s15 + $0x18] sm:$0xff]
          %24 = vst [vmem:[%s16 + $0x18] sm:$0xff] %v23
          %v25 = vld [vmem:[%s15 + $0x20] sm:$0xff]
          %26 = vst [vmem:[%s16 + $0x20] sm:$0xff] %v25
        $region18: #{custom-call.8} parent=12 // loop_footer
          %s14 = sadd.s32 1, %s10
        $region19: #{custom-call.8} parent=12 // loop_footer_branch
          %9 = sbr.rel target = $region15
        $region20: #{custom-call.8} parent=12 // loop_exit
          _
      $region13: #{custom-call.8} parent=4 // pred_fallthru
        _
    $region5: #{custom-call.8} parent=1 // pred_fallthru
      _
    %49 = vnop
    %50 = vst [vmem:[#allocation1] sm:$0xff] 0.0
    %s51 = scalar_lea.vmem [#allocation1], 8
    %52 = vst [vmem:[%s51] sm:$0xff] 0.0
    %s53 = scalar_lea.vmem [#allocation1], 16
    %54 = vst [vmem:[%s53] sm:$0xff] 0.0
    %s55 = scalar_lea.vmem [#allocation1], 24
    %56 = vst [vmem:[%s55] sm:$0xff] 0.0
    %s57 = scalar_lea.vmem [#allocation1], 32
    %58 = vst [vmem:[%s57] sm:$0xff] 0.0
    %vm59 = vcmask 7168
    %v60 = vld [vmem:[#allocation1] ss:$0 sm:$0xff]
    %v61 = vld [vmem:[#allocation0] ss:$0 sm:$0xff]
    %v62 = vmul.f32 %v60, %v60
    %63 = vadd.xlane.f32.xlu0 %v62
    %v64 = vpop.xlane.xlu0 %63
    %v65 = vsub.f32 %v61, %v64
    %v66 = vrsqrt.pop %v65
    %v67 = vld [vmem:[#allocation0] sm:$0xff]
    %v68 = vld [vmem:[#allocation1] sm:$0xff]
    %v69 = vmul.f32 %v68, %v60
    %70 = vadd.xlane.f32.xlu0 %v69
    %v71 = vpop.xlane.xlu0 %70
    %v72 = vsub.f32 %v67, %v71
    %v73 = vmul.f32 %v72, %v66
    %v74 = vsel %vm59, %v73, 0.0
    %v75 = vadd.f32 %v68, %v74
    %76 = vst [vmem:[#allocation1] sm:$0xff] %v75
    %s77 = scalar_lea.vmem [#allocation0], 8
    %v78 = vld [vmem:[%s77] sm:$0xff]
    %s79 = scalar_lea.vmem [#allocation1], 8
    %v80 = vld [vmem:[%s79] sm:$0xff]
    %v81 = vmul.f32 %v80, %v60
    %82 = vadd.xlane.f32.xlu0 %v81
    %v83 = vpop.xlane.xlu0 %82
    %v84 = vsub.f32 %v78, %v83
    %v85 = vmul.f32 %v84, %v66
    %v86 = vsel %vm59, %v85, 0.0
    %v87 = vadd.f32 %v80, %v86
    %s88 = scalar_lea.vmem [#allocation1], 8
    %89 = vst [vmem:[%s88] sm:$0xff] %v87
    %s90 = scalar_lea.vmem [#allocation0], 16
    %v91 = vld [vmem:[%s90] sm:$0xff]
    %s92 = scalar_lea.vmem [#allocation1], 16
    %v93 = vld [vmem:[%s92] sm:$0xff]
    %v94 = vmul.f32 %v93, %v60
    %95 = vadd.xlane.f32.xlu0 %v94
    %v96 = vpop.xlane.xlu0 %95
    %v97 = vsub.f32 %v91, %v96
    %v98 = vmul.f32 %v97, %v66
    %v99 = vsel %vm59, %v98, 0.0
    %v100 = vadd.f32 %v93, %v99
    %s101 = scalar_lea.vmem [#allocation1], 16
    %102 = vst [vmem:[%s101] sm:$0xff] %v100
    %s103 = scalar_lea.vmem [#allocation0], 24
    %v104 = vld [vmem:[%s103] sm:$0xff]
    %s105 = scalar_lea.vmem [#allocation1], 24
    %v106 = vld [vmem:[%s105] sm:$0xff]
    %v107 = vmul.f32 %v106, %v60
    %108 = vadd.xlane.f32.xlu0 %v107
    %v109 = vpop.xlane.xlu0 %108
    %v110 = vsub.f32 %v104, %v109
    %v111 = vmul.f32 %v110, %v66
    %v112 = vsel %vm59, %v111, 0.0
    %v113 = vadd.f32 %v106, %v112
    %s114 = scalar_lea.vmem [#allocation1], 24
    %115 = vst [vmem:[%s114] sm:$0xff] %v113
    %s116 = scalar_lea.vmem [#allocation0], 32
    %v117 = vld [vmem:[%s116] sm:$0xff]
    %s118 = scalar_lea.vmem [#allocation1], 32
    %v119 = vld [vmem:[%s118] sm:$0xff]
    %v120 = vmul.f32 %v119, %v60
    %121 = vadd.xlane.f32.xlu0 %v120
    %v122 = vpop.xlane.xlu0 %121
    %v123 = vsub.f32 %v117, %v122
    %v124 = vmul.f32 %v123, %v66
    %v125 = vsel %vm59, %v124, 0.0
    %v126 = vadd.f32 %v119, %v125
    %s127 = scalar_lea.vmem [#allocation1], 32
    %128 = vst [vmem:[%s127] sm:$0xff] %v126
    %vm129 = vcmask 15368
    %s130 = scalar_lea.vmem [#allocation1], 1
    %v131 = vld [vmem:[%s130] ss:$0 sm:$0xff]
    %s132 = scalar_lea.vmem [#allocation0], 1
    %v133 = vld [vmem:[%s132] ss:$0 sm:$0xff]
    %v134 = vmul.f32 %v131, %v131
    %135 = vadd.xlane.f32.xlu0 %v134
    %v136 = vpop.xlane.xlu0 %135
    %v137 = vsub.f32 %v133, %v136
    %v138 = vrsqrt.pop %v137
    %v139 = vld [vmem:[#allocation0] sm:$0xff]
    %v140 = vld [vmem:[#allocation1] sm:$0xff]
    %v141 = vmul.f32 %v140, %v131
    %142 = vadd.xlane.f32.xlu0 %v141
    %v143 = vpop.xlane.xlu0 %142
    %v144 = vsub.f32 %v139, %v143
    %v145 = vmul.f32 %v144, %v138
    %vm146 = vcmask 1047553
    %vm147 = vmand %vm129, %vm146
    %v148 = vsel %vm147, %v145, 0.0
    %v149 = vadd.f32 %v140, %v148
    %150 = vst [vmem:[#allocation1] sm:$0xff] %v149
    %s151 = scalar_lea.vmem [#allocation0], 8
    %v152 = vld [vmem:[%s151] sm:$0xff]
    %s153 = scalar_lea.vmem [#allocation1], 8
    %v154 = vld [vmem:[%s153] sm:$0xff]
    %v155 = vmul.f32 %v154, %v131
    %156 = vadd.xlane.f32.xlu0 %v155
    %v157 = vpop.xlane.xlu0 %156
    %v158 = vsub.f32 %v152, %v157
    %v159 = vmul.f32 %v158, %v138
    %v160 = vsel %vm129, %v159, 0.0
    %v161 = vadd.f32 %v154, %v160
    %s162 = scalar_lea.vmem [#allocation1], 8
    %163 = vst [vmem:[%s162] sm:$0xff] %v161
    %s164 = scalar_lea.vmem [#allocation0], 16
    %v165 = vld [vmem:[%s164] sm:$0xff]
    %s166 = scalar_lea.vmem [#allocation1], 16
    %v167 = vld [vmem:[%s166] sm:$0xff]
    %v168 = vmul.f32 %v167, %v131
    %169 = vadd.xlane.f32.xlu0 %v168
    %v170 = vpop.xlane.xlu0 %169
    %v171 = vsub.f32 %v165, %v170
    %v172 = vmul.f32 %v171, %v138
    %v173 = vsel %vm129, %v172, 0.0
    %v174 = vadd.f32 %v167, %v173
    %s175 = scalar_lea.vmem [#allocation1], 16
    %176 = vst [vmem:[%s175] sm:$0xff] %v174
    %s177 = scalar_lea.vmem [#allocation0], 24
    %v178 = vld [vmem:[%s177] sm:$0xff]
    %s179 = scalar_lea.vmem [#allocation1], 24
    %v180 = vld [vmem:[%s179] sm:$0xff]
    %v181 = vmul.f32 %v180, %v131
    %182 = vadd.xlane.f32.xlu0 %v181
    %v183 = vpop.xlane.xlu0 %182
    %v184 = vsub.f32 %v178, %v183
    %v185 = vmul.f32 %v184, %v138
    %v186 = vsel %vm129, %v185, 0.0
    %v187 = vadd.f32 %v180, %v186
    %s188 = scalar_lea.vmem [#allocation1], 24
    %189 = vst [vmem:[%s188] sm:$0xff] %v187
    %s190 = scalar_lea.vmem [#allocation0], 32
    %v191 = vld [vmem:[%s190] sm:$0xff]
    %s192 = scalar_lea.vmem [#allocation1], 32
    %v193 = vld [vmem:[%s192] sm:$0xff]
    %v194 = vmul.f32 %v193, %v131
    %195 = vadd.xlane.f32.xlu0 %v194
    %v196 = vpop.xlane.xlu0 %195
    %v197 = vsub.f32 %v191, %v196
    %v198 = vmul.f32 %v197, %v138
    %v199 = vsel %vm129, %v198, 0.0
    %v200 = vadd.f32 %v193, %v199
    %s201 = scalar_lea.vmem [#allocation1], 32
    %202 = vst [vmem:[%s201] sm:$0xff] %v200
    %vm203 = vcmask 23568
    %s204 = scalar_lea.vmem [#allocation1], 2
    %v205 = vld [vmem:[%s204] ss:$0 sm:$0xff]
    %s206 = scalar_lea.vmem [#allocation0], 2
    %v207 = vld [vmem:[%s206] ss:$0 sm:$0xff]
    %v208 = vmul.f32 %v205, %v205
    %209 = vadd.xlane.f32.xlu0 %v208
    %v210 = vpop.xlane.xlu0 %209
    %v211 = vsub.f32 %v207, %v210
    %v212 = vrsqrt.pop %v211
    %v213 = vld [vmem:[#allocation0] sm:$0xff]
    %v214 = vld [vmem:[#allocation1] sm:$0xff]
    %v215 = vmul.f32 %v214, %v205
    %216 = vadd.xlane.f32.xlu0 %v215
    %v217 = vpop.xlane.xlu0 %216
    %v218 = vsub.f32 %v213, %v217
    %v219 = vmul.f32 %v218, %v212
    %vm220 = vcmask 1047554
    %vm221 = vmand %vm203, %vm220
    %v222 = vsel %vm221, %v219, 0.0
    %v223 = vadd.f32 %v214, %v222
    %224 = vst [vmem:[#allocation1] sm:$0xff] %v223
    %s225 = scalar_lea.vmem [#allocation0], 8
    %v226 = vld [vmem:[%s225] sm:$0xff]
    %s227 = scalar_lea.vmem [#allocation1], 8
    %v228 = vld [vmem:[%s227] sm:$0xff]
    %v229 = vmul.f32 %v228, %v205
    %230 = vadd.xlane.f32.xlu0 %v229
    %v231 = vpop.xlane.xlu0 %230
    %v232 = vsub.f32 %v226, %v231
    %v233 = vmul.f32 %v232, %v212
    %v234 = vsel %vm203, %v233, 0.0
    %v235 = vadd.f32 %v228, %v234
    %s236 = scalar_lea.vmem [#allocation1], 8
    %237 = vst [vmem:[%s236] sm:$0xff] %v235
    %s238 = scalar_lea.vmem [#allocation0], 16
    %v239 = vld [vmem:[%s238] sm:$0xff]
    %s240 = scalar_lea.vmem [#allocation1], 16
    %v241 = vld [vmem:[%s240] sm:$0xff]
    %v242 = vmul.f32 %v241, %v205
    %243 = vadd.xlane.f32.xlu0 %v242
    %v244 = vpop.xlane.xlu0 %243
    %v245 = vsub.f32 %v239, %v244
    %v246 = vmul.f32 %v245, %v212
    %v247 = vsel %vm203, %v246, 0.0
    %v248 = vadd.f32 %v241, %v247
    %s249 = scalar_lea.vmem [#allocation1], 16
    %250 = vst [vmem:[%s249] sm:$0xff] %v248
    %s251 = scalar_lea.vmem [#allocation0], 24
    %v252 = vld [vmem:[%s251] sm:$0xff]
    %s253 = scalar_lea.vmem [#allocation1], 24
    %v254 = vld [vmem:[%s253] sm:$0xff]
    %v255 = vmul.f32 %v254, %v205
    %256 = vadd.xlane.f32.xlu0 %v255
    %v257 = vpop.xlane.xlu0 %256
    %v258 = vsub.f32 %v252, %v257
    %v259 = vmul.f32 %v258, %v212
    %v260 = vsel %vm203, %v259, 0.0
    %v261 = vadd.f32 %v254, %v260
    %s262 = scalar_lea.vmem [#allocation1], 24
    %263 = vst [vmem:[%s262] sm:$0xff] %v261
    %s264 = scalar_lea.vmem [#allocation0], 32
    %v265 = vld [vmem:[%s264] sm:$0xff]
    %s266 = scalar_lea.vmem [#allocation1], 32
    %v267 = vld [vmem:[%s266] sm:$0xff]
    %v268 = vmul.f32 %v267, %v205
    %269 = vadd.xlane.f32.xlu0 %v268
    %v270 = vpop.xlane.xlu0 %269
    %v271 = vsub.f32 %v265, %v270
    %v272 = vmul.f32 %v271, %v212
    %v273 = vsel %vm203, %v272, 0.0
    %v274 = vadd.f32 %v267, %v273
    %s275 = scalar_lea.vmem [#allocation1], 32
    %276 = vst [vmem:[%s275] sm:$0xff] %v274
    %vm277 = vcmask 31768
    %s278 = scalar_lea.vmem [#allocation1], 3
    %v279 = vld [vmem:[%s278] ss:$0 sm:$0xff]
    %s280 = scalar_lea.vmem [#allocation0], 3
    %v281 = vld [vmem:[%s280] ss:$0 sm:$0xff]
    %v282 = vmul.f32 %v279, %v279
    %283 = vadd.xlane.f32.xlu0 %v282
    %v284 = vpop.xlane.xlu0 %283
    %v285 = vsub.f32 %v281, %v284
    %v286 = vrsqrt.pop %v285
    %v287 = vld [vmem:[#allocation0] sm:$0xff]
    %v288 = vld [vmem:[#allocation1] sm:$0xff]
    %v289 = vmul.f32 %v288, %v279
    %290 = vadd.xlane.f32.xlu0 %v289
    %v291 = vpop.xlane.xlu0 %290
    %v292 = vsub.f32 %v287, %v291
    %v293 = vmul.f32 %v292, %v286
    %vm294 = vcmask 1047555
    %vm295 = vmand %vm277, %vm294
    %v296 = vsel %vm295, %v293, 0.0
    %v297 = vadd.f32 %v288, %v296
    %298 = vst [vmem:[#allocation1] sm:$0xff] %v297
    %s299 = scalar_lea.vmem [#allocation0], 8
    %v300 = vld [vmem:[%s299] sm:$0xff]
    %s301 = scalar_lea.vmem [#allocation1], 8
    %v302 = vld [vmem:[%s301] sm:$0xff]
    %v303 = vmul.f32 %v302, %v279
    %304 = vadd.xlane.f32.xlu0 %v303
    %v305 = vpop.xlane.xlu0 %304
    %v306 = vsub.f32 %v300, %v305
    %v307 = vmul.f32 %v306, %v286
    %v308 = vsel %vm277, %v307, 0.0
    %v309 = vadd.f32 %v302, %v308
    %s310 = scalar_lea.vmem [#allocation1], 8
    %311 = vst [vmem:[%s310] sm:$0xff] %v309
    %s312 = scalar_lea.vmem [#allocation0], 16
    %v313 = vld [vmem:[%s312] sm:$0xff]
    %s314 = scalar_lea.vmem [#allocation1], 16
    %v315 = vld [vmem:[%s314] sm:$0xff]
    %v316 = vmul.f32 %v315, %v279
    %317 = vadd.xlane.f32.xlu0 %v316
    %v318 = vpop.xlane.xlu0 %317
    %v319 = vsub.f32 %v313, %v318
    %v320 = vmul.f32 %v319, %v286
    %v321 = vsel %vm277, %v320, 0.0
    %v322 = vadd.f32 %v315, %v321
    %s323 = scalar_lea.vmem [#allocation1], 16
    %324 = vst [vmem:[%s323] sm:$0xff] %v322
    %s325 = scalar_lea.vmem [#allocation0], 24
    %v326 = vld [vmem:[%s325] sm:$0xff]
    %s327 = scalar_lea.vmem [#allocation1], 24
    %v328 = vld [vmem:[%s327] sm:$0xff]
    %v329 = vmul.f32 %v328, %v279
    %330 = vadd.xlane.f32.xlu0 %v329
    %v331 = vpop.xlane.xlu0 %330
    %v332 = vsub.f32 %v326, %v331
    %v333 = vmul.f32 %v332, %v286
    %v334 = vsel %vm277, %v333, 0.0
    %v335 = vadd.f32 %v328, %v334
    %s336 = scalar_lea.vmem [#allocation1], 24
    %337 = vst [vmem:[%s336] sm:$0xff] %v335
    %s338 = scalar_lea.vmem [#allocation0], 32
    %v339 = vld [vmem:[%s338] sm:$0xff]
    %s340 = scalar_lea.vmem [#allocation1], 32
    %v341 = vld [vmem:[%s340] sm:$0xff]
    %v342 = vmul.f32 %v341, %v279
    %343 = vadd.xlane.f32.xlu0 %v342
    %v344 = vpop.xlane.xlu0 %343
    %v345 = vsub.f32 %v339, %v344
    %v346 = vmul.f32 %v345, %v286
    %v347 = vsel %vm277, %v346, 0.0
    %v348 = vadd.f32 %v341, %v347
    %s349 = scalar_lea.vmem [#allocation1], 32
    %350 = vst [vmem:[%s349] sm:$0xff] %v348
    %vm351 = vcmask 39968
    %s352 = scalar_lea.vmem [#allocation1], 4
    %v353 = vld [vmem:[%s352] ss:$0 sm:$0xff]
    %s354 = scalar_lea.vmem [#allocation0], 4
    %v355 = vld [vmem:[%s354] ss:$0 sm:$0xff]
    %v356 = vmul.f32 %v353, %v353
    %357 = vadd.xlane.f32.xlu0 %v356
    %v358 = vpop.xlane.xlu0 %357
    %v359 = vsub.f32 %v355, %v358
    %v360 = vrsqrt.pop %v359
    %v361 = vld [vmem:[#allocation0] sm:$0xff]
    %v362 = vld [vmem:[#allocation1] sm:$0xff]
    %v363 = vmul.f32 %v362, %v353
    %364 = vadd.xlane.f32.xlu0 %v363
    %v365 = vpop.xlane.xlu0 %364
    %v366 = vsub.f32 %v361, %v365
    %v367 = vmul.f32 %v366, %v360
    %vm368 = vcmask 1047556
    %vm369 = vmand %vm351, %vm368
    %v370 = vsel %vm369, %v367, 0.0
    %v371 = vadd.f32 %v362, %v370
    %372 = vst [vmem:[#allocation1] sm:$0xff] %v371
    %s373 = scalar_lea.vmem [#allocation0], 8
    %v374 = vld [vmem:[%s373] sm:$0xff]
    %s375 = scalar_lea.vmem [#allocation1], 8
    %v376 = vld [vmem:[%s375] sm:$0xff]
    %v377 = vmul.f32 %v376, %v353
    %378 = vadd.xlane.f32.xlu0 %v377
    %v379 = vpop.xlane.xlu0 %378
    %v380 = vsub.f32 %v374, %v379
    %v381 = vmul.f32 %v380, %v360
    %v382 = vsel %vm351, %v381, 0.0
    %v383 = vadd.f32 %v376, %v382
    %s384 = scalar_lea.vmem [#allocation1], 8
    %385 = vst [vmem:[%s384] sm:$0xff] %v383
    %s386 = scalar_lea.vmem [#allocation0], 16
    %v387 = vld [vmem:[%s386] sm:$0xff]
    %s388 = scalar_lea.vmem [#allocation1], 16
    %v389 = vld [vmem:[%s388] sm:$0xff]
    %v390 = vmul.f32 %v389, %v353
    %391 = vadd.xlane.f32.xlu0 %v390
    %v392 = vpop.xlane.xlu0 %391
    %v393 = vsub.f32 %v387, %v392
    %v394 = vmul.f32 %v393, %v360
    %v395 = vsel %vm351, %v394, 0.0
    %v396 = vadd.f32 %v389, %v395
    %s397 = scalar_lea.vmem [#allocation1], 16
    %398 = vst [vmem:[%s397] sm:$0xff] %v396
    %s399 = scalar_lea.vmem [#allocation0], 24
    %v400 = vld [vmem:[%s399] sm:$0xff]
    %s401 = scalar_lea.vmem [#allocation1], 24
    %v402 = vld [vmem:[%s401] sm:$0xff]
    %v403 = vmul.f32 %v402, %v353
    %404 = vadd.xlane.f32.xlu0 %v403
    %v405 = vpop.xlane.xlu0 %404
    %v406 = vsub.f32 %v400, %v405
    %v407 = vmul.f32 %v406, %v360
    %v408 = vsel %vm351, %v407, 0.0
    %v409 = vadd.f32 %v402, %v408
    %s410 = scalar_lea.vmem [#allocation1], 24
    %411 = vst [vmem:[%s410] sm:$0xff] %v409
    %s412 = scalar_lea.vmem [#allocation0], 32
    %v413 = vld [vmem:[%s412] sm:$0xff]
    %s414 = scalar_lea.vmem [#allocation1], 32
    %v415 = vld [vmem:[%s414] sm:$0xff]
    %v416 = vmul.f32 %v415, %v353
    %417 = vadd.xlane.f32.xlu0 %v416
    %v418 = vpop.xlane.xlu0 %417
    %v419 = vsub.f32 %v413, %v418
    %v420 = vmul.f32 %v419, %v360
    %v421 = vsel %vm351, %v420, 0.0
    %v422 = vadd.f32 %v415, %v421
    %s423 = scalar_lea.vmem [#allocation1], 32
    %424 = vst [vmem:[%s423] sm:$0xff] %v422
    %vm425 = vcmask 48168
    %s426 = scalar_lea.vmem [#allocation1], 5
    %v427 = vld [vmem:[%s426] ss:$0 sm:$0xff]
    %s428 = scalar_lea.vmem [#allocation0], 5
    %v429 = vld [vmem:[%s428] ss:$0 sm:$0xff]
    %v430 = vmul.f32 %v427, %v427
    %431 = vadd.xlane.f32.xlu0 %v430
    %v432 = vpop.xlane.xlu0 %431
    %v433 = vsub.f32 %v429, %v432
    %v434 = vrsqrt.pop %v433
    %v435 = vld [vmem:[#allocation0] sm:$0xff]
    %v436 = vld [vmem:[#allocation1] sm:$0xff]
    %v437 = vmul.f32 %v436, %v427
    %438 = vadd.xlane.f32.xlu0 %v437
    %v439 = vpop.xlane.xlu0 %438
    %v440 = vsub.f32 %v435, %v439
    %v441 = vmul.f32 %v440, %v434
    %vm442 = vcmask 1047557
    %vm443 = vmand %vm425, %vm442
    %v444 = vsel %vm443, %v441, 0.0
    %v445 = vadd.f32 %v436, %v444
    %446 = vst [vmem:[#allocation1] sm:$0xff] %v445
    %s447 = scalar_lea.vmem [#allocation0], 8
    %v448 = vld [vmem:[%s447] sm:$0xff]
    %s449 = scalar_lea.vmem [#allocation1], 8
    %v450 = vld [vmem:[%s449] sm:$0xff]
    %v451 = vmul.f32 %v450, %v427
    %452 = vadd.xlane.f32.xlu0 %v451
    %v453 = vpop.xlane.xlu0 %452
    %v454 = vsub.f32 %v448, %v453
    %v455 = vmul.f32 %v454, %v434
    %v456 = vsel %vm425, %v455, 0.0
    %v457 = vadd.f32 %v450, %v456
    %s458 = scalar_lea.vmem [#allocation1], 8
    %459 = vst [vmem:[%s458] sm:$0xff] %v457
    %s460 = scalar_lea.vmem [#allocation0], 16
    %v461 = vld [vmem:[%s460] sm:$0xff]
    %s462 = scalar_lea.vmem [#allocation1], 16
    %v463 = vld [vmem:[%s462] sm:$0xff]
    %v464 = vmul.f32 %v463, %v427
    %465 = vadd.xlane.f32.xlu0 %v464
    %v466 = vpop.xlane.xlu0 %465
    %v467 = vsub.f32 %v461, %v466
    %v468 = vmul.f32 %v467, %v434
    %v469 = vsel %vm425, %v468, 0.0
    %v470 = vadd.f32 %v463, %v469
    %s471 = scalar_lea.vmem [#allocation1], 16
    %472 = vst [vmem:[%s471] sm:$0xff] %v470
    %s473 = scalar_lea.vmem [#allocation0], 24
    %v474 = vld [vmem:[%s473] sm:$0xff]
    %s475 = scalar_lea.vmem [#allocation1], 24
    %v476 = vld [vmem:[%s475] sm:$0xff]
    %v477 = vmul.f32 %v476, %v427
    %478 = vadd.xlane.f32.xlu0 %v477
    %v479 = vpop.xlane.xlu0 %478
    %v480 = vsub.f32 %v474, %v479
    %v481 = vmul.f32 %v480, %v434
    %v482 = vsel %vm425, %v481, 0.0
    %v483 = vadd.f32 %v476, %v482
    %s484 = scalar_lea.vmem [#allocation1], 24
    %485 = vst [vmem:[%s484] sm:$0xff] %v483
    %s486 = scalar_lea.vmem [#allocation0], 32
    %v487 = vld [vmem:[%s486] sm:$0xff]
    %s488 = scalar_lea.vmem [#allocation1], 32
    %v489 = vld [vmem:[%s488] sm:$0xff]
    %v490 = vmul.f32 %v489, %v427
    %491 = vadd.xlane.f32.xlu0 %v490
    %v492 = vpop.xlane.xlu0 %491
    %v493 = vsub.f32 %v487, %v492
    %v494 = vmul.f32 %v493, %v434
    %v495 = vsel %vm425, %v494, 0.0
    %v496 = vadd.f32 %v489, %v495
    %s497 = scalar_lea.vmem [#allocation1], 32
    %498 = vst [vmem:[%s497] sm:$0xff] %v496
    %vm499 = vcmask 56368
    %s500 = scalar_lea.vmem [#allocation1], 6
    %v501 = vld [vmem:[%s500] ss:$0 sm:$0xff]
    %s502 = scalar_lea.vmem [#allocation0], 6
    %v503 = vld [vmem:[%s502] ss:$0 sm:$0xff]
    %v504 = vmul.f32 %v501, %v501
    %505 = vadd.xlane.f32.xlu0 %v504
    %v506 = vpop.xlane.xlu0 %505
    %v507 = vsub.f32 %v503, %v506
    %v508 = vrsqrt.pop %v507
    %v509 = vld [vmem:[#allocation0] sm:$0xff]
    %v510 = vld [vmem:[#allocation1] sm:$0xff]
    %v511 = vmul.f32 %v510, %v501
    %512 = vadd.xlane.f32.xlu0 %v511
    %v513 = vpop.xlane.xlu0 %512
    %v514 = vsub.f32 %v509, %v513
    %v515 = vmul.f32 %v514, %v508
    %vm516 = vcmask 1047558
    %vm517 = vmand %vm499, %vm516
    %v518 = vsel %vm517, %v515, 0.0
    %v519 = vadd.f32 %v510, %v518
    %520 = vst [vmem:[#allocation1] sm:$0xff] %v519
    %s521 = scalar_lea.vmem [#allocation0], 8
    %v522 = vld [vmem:[%s521] sm:$0xff]
    %s523 = scalar_lea.vmem [#allocation1], 8
    %v524 = vld [vmem:[%s523] sm:$0xff]
    %v525 = vmul.f32 %v524, %v501
    %526 = vadd.xlane.f32.xlu0 %v525
    %v527 = vpop.xlane.xlu0 %526
    %v528 = vsub.f32 %v522, %v527
    %v529 = vmul.f32 %v528, %v508
    %v530 = vsel %vm499, %v529, 0.0
    %v531 = vadd.f32 %v524, %v530
    %s532 = scalar_lea.vmem [#allocation1], 8
    %533 = vst [vmem:[%s532] sm:$0xff] %v531
    %s534 = scalar_lea.vmem [#allocation0], 16
    %v535 = vld [vmem:[%s534] sm:$0xff]
    %s536 = scalar_lea.vmem [#allocation1], 16
    %v537 = vld [vmem:[%s536] sm:$0xff]
    %v538 = vmul.f32 %v537, %v501
    %539 = vadd.xlane.f32.xlu0 %v538
    %v540 = vpop.xlane.xlu0 %539
    %v541 = vsub.f32 %v535, %v540
    %v542 = vmul.f32 %v541, %v508
    %v543 = vsel %vm499, %v542, 0.0
    %v544 = vadd.f32 %v537, %v543
    %s545 = scalar_lea.vmem [#allocation1], 16
    %546 = vst [vmem:[%s545] sm:$0xff] %v544
    %s547 = scalar_lea.vmem [#allocation0], 24
    %v548 = vld [vmem:[%s547] sm:$0xff]
    %s549 = scalar_lea.vmem [#allocation1], 24
    %v550 = vld [vmem:[%s549] sm:$0xff]
    %v551 = vmul.f32 %v550, %v501
    %552 = vadd.xlane.f32.xlu0 %v551
    %v553 = vpop.xlane.xlu0 %552
    %v554 = vsub.f32 %v548, %v553
    %v555 = vmul.f32 %v554, %v508
    %v556 = vsel %vm499, %v555, 0.0
    %v557 = vadd.f32 %v550, %v556
    %s558 = scalar_lea.vmem [#allocation1], 24
    %559 = vst [vmem:[%s558] sm:$0xff] %v557
    %s560 = scalar_lea.vmem [#allocation0], 32
    %v561 = vld [vmem:[%s560] sm:$0xff]
    %s562 = scalar_lea.vmem [#allocation1], 32
    %v563 = vld [vmem:[%s562] sm:$0xff]
    %v564 = vmul.f32 %v563, %v501
    %565 = vadd.xlane.f32.xlu0 %v564
    %v566 = vpop.xlane.xlu0 %565
    %v567 = vsub.f32 %v561, %v566
    %v568 = vmul.f32 %v567, %v508
    %v569 = vsel %vm499, %v568, 0.0
    %v570 = vadd.f32 %v563, %v569
    %s571 = scalar_lea.vmem [#allocation1], 32
    %572 = vst [vmem:[%s571] sm:$0xff] %v570
    %vm573 = vcmask 64568
    %s574 = scalar_lea.vmem [#allocation1], 7
    %v575 = vld [vmem:[%s574] ss:$0 sm:$0xff]
    %s576 = scalar_lea.vmem [#allocation0], 7
    %v577 = vld [vmem:[%s576] ss:$0 sm:$0xff]
    %v578 = vmul.f32 %v575, %v575
    %579 = vadd.xlane.f32.xlu0 %v578
    %v580 = vpop.xlane.xlu0 %579
    %v581 = vsub.f32 %v577, %v580
    %v582 = vrsqrt.pop %v581
    %v583 = vld [vmem:[#allocation0] sm:$0xff]
    %v584 = vld [vmem:[#allocation1] sm:$0xff]
    %v585 = vmul.f32 %v584, %v575
    %586 = vadd.xlane.f32.xlu0 %v585
    %v587 = vpop.xlane.xlu0 %586
    %v588 = vsub.f32 %v583, %v587
    %v589 = vmul.f32 %v588, %v582
    %vm590 = vcmask 1047559
    %vm591 = vmand %vm573, %vm590
    %v592 = vsel %vm591, %v589, 0.0
    %v593 = vadd.f32 %v584, %v592
    %594 = vst [vmem:[#allocation1] sm:$0xff] %v593
    %s595 = scalar_lea.vmem [#allocation0], 8
    %v596 = vld [vmem:[%s595] sm:$0xff]
    %s597 = scalar_lea.vmem [#allocation1], 8
    %v598 = vld [vmem:[%s597] sm:$0xff]
    %v599 = vmul.f32 %v598, %v575
    %600 = vadd.xlane.f32.xlu0 %v599
    %v601 = vpop.xlane.xlu0 %600
    %v602 = vsub.f32 %v596, %v601
    %v603 = vmul.f32 %v602, %v582
    %v604 = vsel %vm573, %v603, 0.0
    %v605 = vadd.f32 %v598, %v604
    %s606 = scalar_lea.vmem [#allocation1], 8
    %607 = vst [vmem:[%s606] sm:$0xff] %v605
    %s608 = scalar_lea.vmem [#allocation0], 16
    %v609 = vld [vmem:[%s608] sm:$0xff]
    %s610 = scalar_lea.vmem [#allocation1], 16
    %v611 = vld [vmem:[%s610] sm:$0xff]
    %v612 = vmul.f32 %v611, %v575
    %613 = vadd.xlane.f32.xlu0 %v612
    %v614 = vpop.xlane.xlu0 %613
    %v615 = vsub.f32 %v609, %v614
    %v616 = vmul.f32 %v615, %v582
    %v617 = vsel %vm573, %v616, 0.0
    %v618 = vadd.f32 %v611, %v617
    %s619 = scalar_lea.vmem [#allocation1], 16
    %620 = vst [vmem:[%s619] sm:$0xff] %v618
    %s621 = scalar_lea.vmem [#allocation0], 24
    %v622 = vld [vmem:[%s621] sm:$0xff]
    %s623 = scalar_lea.vmem [#allocation1], 24
    %v624 = vld [vmem:[%s623] sm:$0xff]
    %v625 = vmul.f32 %v624, %v575
    %626 = vadd.xlane.f32.xlu0 %v625
    %v627 = vpop.xlane.xlu0 %626
    %v628 = vsub.f32 %v622, %v627
    %v629 = vmul.f32 %v628, %v582
    %v630 = vsel %vm573, %v629, 0.0
    %v631 = vadd.f32 %v624, %v630
    %s632 = scalar_lea.vmem [#allocation1], 24
    %633 = vst [vmem:[%s632] sm:$0xff] %v631
    %s634 = scalar_lea.vmem [#allocation0], 32
    %v635 = vld [vmem:[%s634] sm:$0xff]
    %s636 = scalar_lea.vmem [#allocation1], 32
    %v637 = vld [vmem:[%s636] sm:$0xff]
    %v638 = vmul.f32 %v637, %v575
    %639 = vadd.xlane.f32.xlu0 %v638
    %v640 = vpop.xlane.xlu0 %639
    %v641 = vsub.f32 %v635, %v640
    %v642 = vmul.f32 %v641, %v582
    %v643 = vsel %vm573, %v642, 0.0
    %v644 = vadd.f32 %v637, %v643
    %s645 = scalar_lea.vmem [#allocation1], 32
    %646 = vst [vmem:[%s645] sm:$0xff] %v644
    %vm647 = vcmask 72768
    %s648 = scalar_lea.vmem [#allocation1], 8
    %v649 = vld [vmem:[%s648] ss:$0 sm:$0xff]
    %s650 = scalar_lea.vmem [#allocation0], 8
    %v651 = vld [vmem:[%s650] ss:$0 sm:$0xff]
    %v652 = vmul.f32 %v649, %v649
    %653 = vadd.xlane.f32.xlu0 %v652
    %v654 = vpop.xlane.xlu0 %653
    %v655 = vsub.f32 %v651, %v654
    %v656 = vrsqrt.pop %v655
    %s657 = scalar_lea.vmem [#allocation0], 8
    %v658 = vld [vmem:[%s657] sm:$0xff]
    %s659 = scalar_lea.vmem [#allocation1], 8
    %v660 = vld [vmem:[%s659] sm:$0xff]
    %v661 = vmul.f32 %v660, %v649
    %662 = vadd.xlane.f32.xlu0 %v661
    %v663 = vpop.xlane.xlu0 %662
    %v664 = vsub.f32 %v658, %v663
    %v665 = vmul.f32 %v664, %v656
    %v666 = vsel %vm647, %v665, 0.0
    %v667 = vadd.f32 %v660, %v666
    %s668 = scalar_lea.vmem [#allocation1], 8
    %669 = vst [vmem:[%s668] sm:$0xff] %v667
    %s670 = scalar_lea.vmem [#allocation0], 16
    %v671 = vld [vmem:[%s670] sm:$0xff]
    %s672 = scalar_lea.vmem [#allocation1], 16
    %v673 = vld [vmem:[%s672] sm:$0xff]
    %v674 = vmul.f32 %v673, %v649
    %675 = vadd.xlane.f32.xlu0 %v674
    %v676 = vpop.xlane.xlu0 %675
    %v677 = vsub.f32 %v671, %v676
    %v678 = vmul.f32 %v677, %v656
    %v679 = vsel %vm647, %v678, 0.0
    %v680 = vadd.f32 %v673, %v679
    %s681 = scalar_lea.vmem [#allocation1], 16
    %682 = vst [vmem:[%s681] sm:$0xff] %v680
    %s683 = scalar_lea.vmem [#allocation0], 24
    %v684 = vld [vmem:[%s683] sm:$0xff]
    %s685 = scalar_lea.vmem [#allocation1], 24
    %v686 = vld [vmem:[%s685] sm:$0xff]
    %v687 = vmul.f32 %v686, %v649
    %688 = vadd.xlane.f32.xlu0 %v687
    %v689 = vpop.xlane.xlu0 %688
    %v690 = vsub.f32 %v684, %v689
    %v691 = vmul.f32 %v690, %v656
    %v692 = vsel %vm647, %v691, 0.0
    %v693 = vadd.f32 %v686, %v692
    %s694 = scalar_lea.vmem [#allocation1], 24
    %695 = vst [vmem:[%s694] sm:$0xff] %v693
    %s696 = scalar_lea.vmem [#allocation0], 32
    %v697 = vld [vmem:[%s696] sm:$0xff]
    %s698 = scalar_lea.vmem [#allocation1], 32
    %v699 = vld [vmem:[%s698] sm:$0xff]
    %v700 = vmul.f32 %v699, %v649
    %701 = vadd.xlane.f32.xlu0 %v700
    %v702 = vpop.xlane.xlu0 %701
    %v703 = vsub.f32 %v697, %v702
    %v704 = vmul.f32 %v703, %v656
    %v705 = vsel %vm647, %v704, 0.0
    %v706 = vadd.f32 %v699, %v705
    %s707 = scalar_lea.vmem [#allocation1], 32
    %708 = vst [vmem:[%s707] sm:$0xff] %v706
    %vm709 = vcmask 80968
    %s710 = scalar_lea.vmem [#allocation1], 9
    %v711 = vld [vmem:[%s710] ss:$0 sm:$0xff]
    %s712 = scalar_lea.vmem [#allocation0], 9
    %v713 = vld [vmem:[%s712] ss:$0 sm:$0xff]
    %v714 = vmul.f32 %v711, %v711
    %715 = vadd.xlane.f32.xlu0 %v714
    %v716 = vpop.xlane.xlu0 %715
    %v717 = vsub.f32 %v713, %v716
    %v718 = vrsqrt.pop %v717
    %s719 = scalar_lea.vmem [#allocation0], 8
    %v720 = vld [vmem:[%s719] sm:$0xff]
    %s721 = scalar_lea.vmem [#allocation1], 8
    %v722 = vld [vmem:[%s721] sm:$0xff]
    %v723 = vmul.f32 %v722, %v711
    %724 = vadd.xlane.f32.xlu0 %v723
    %v725 = vpop.xlane.xlu0 %724
    %v726 = vsub.f32 %v720, %v725
    %v727 = vmul.f32 %v726, %v718
    %vm728 = vcmask 1047553
    %vm729 = vmand %vm709, %vm728
    %v730 = vsel %vm729, %v727, 0.0
    %v731 = vadd.f32 %v722, %v730
    %s732 = scalar_lea.vmem [#allocation1], 8
    %733 = vst [vmem:[%s732] sm:$0xff] %v731
    %s734 = scalar_lea.vmem [#allocation0], 16
    %v735 = vld [vmem:[%s734] sm:$0xff]
    %s736 = scalar_lea.vmem [#allocation1], 16
    %v737 = vld [vmem:[%s736] sm:$0xff]
    %v738 = vmul.f32 %v737, %v711
    %739 = vadd.xlane.f32.xlu0 %v738
    %v740 = vpop.xlane.xlu0 %739
    %v741 = vsub.f32 %v735, %v740
    %v742 = vmul.f32 %v741, %v718
    %v743 = vsel %vm709, %v742, 0.0
    %v744 = vadd.f32 %v737, %v743
    %s745 = scalar_lea.vmem [#allocation1], 16
    %746 = vst [vmem:[%s745] sm:$0xff] %v744
    %s747 = scalar_lea.vmem [#allocation0], 24
    %v748 = vld [vmem:[%s747] sm:$0xff]
    %s749 = scalar_lea.vmem [#allocation1], 24
    %v750 = vld [vmem:[%s749] sm:$0xff]
    %v751 = vmul.f32 %v750, %v711
    %752 = vadd.xlane.f32.xlu0 %v751
    %v753 = vpop.xlane.xlu0 %752
    %v754 = vsub.f32 %v748, %v753
    %v755 = vmul.f32 %v754, %v718
    %v756 = vsel %vm709, %v755, 0.0
    %v757 = vadd.f32 %v750, %v756
    %s758 = scalar_lea.vmem [#allocation1], 24
    %759 = vst [vmem:[%s758] sm:$0xff] %v757
    %s760 = scalar_lea.vmem [#allocation0], 32
    %v761 = vld [vmem:[%s760] sm:$0xff]
    %s762 = scalar_lea.vmem [#allocation1], 32
    %v763 = vld [vmem:[%s762] sm:$0xff]
    %v764 = vmul.f32 %v763, %v711
    %765 = vadd.xlane.f32.xlu0 %v764
    %v766 = vpop.xlane.xlu0 %765
    %v767 = vsub.f32 %v761, %v766
    %v768 = vmul.f32 %v767, %v718
    %v769 = vsel %vm709, %v768, 0.0
    %v770 = vadd.f32 %v763, %v769
    %s771 = scalar_lea.vmem [#allocation1], 32
    %772 = vst [vmem:[%s771] sm:$0xff] %v770
    %vm773 = vcmask 89168
    %s774 = scalar_lea.vmem [#allocation1], 10
    %v775 = vld [vmem:[%s774] ss:$0 sm:$0xff]
    %s776 = scalar_lea.vmem [#allocation0], 10
    %v777 = vld [vmem:[%s776] ss:$0 sm:$0xff]
    %v778 = vmul.f32 %v775, %v775
    %779 = vadd.xlane.f32.xlu0 %v778
    %v780 = vpop.xlane.xlu0 %779
    %v781 = vsub.f32 %v777, %v780
    %v782 = vrsqrt.pop %v781
    %s783 = scalar_lea.vmem [#allocation0], 8
    %v784 = vld [vmem:[%s783] sm:$0xff]
    %s785 = scalar_lea.vmem [#allocation1], 8
    %v786 = vld [vmem:[%s785] sm:$0xff]
    %v787 = vmul.f32 %v786, %v775
    %788 = vadd.xlane.f32.xlu0 %v787
    %v789 = vpop.xlane.xlu0 %788
    %v790 = vsub.f32 %v784, %v789
    %v791 = vmul.f32 %v790, %v782
    %vm792 = vcmask 1047554
    %vm793 = vmand %vm773, %vm792
    %v794 = vsel %vm793, %v791, 0.0
    %v795 = vadd.f32 %v786, %v794
    %s796 = scalar_lea.vmem [#allocation1], 8
    %797 = vst [vmem:[%s796] sm:$0xff] %v795
    %s798 = scalar_lea.vmem [#allocation0], 16
    %v799 = vld [vmem:[%s798] sm:$0xff]
    %s800 = scalar_lea.vmem [#allocation1], 16
    %v801 = vld [vmem:[%s800] sm:$0xff]
    %v802 = vmul.f32 %v801, %v775
    %803 = vadd.xlane.f32.xlu0 %v802
    %v804 = vpop.xlane.xlu0 %803
    %v805 = vsub.f32 %v799, %v804
    %v806 = vmul.f32 %v805, %v782
    %v807 = vsel %vm773, %v806, 0.0
    %v808 = vadd.f32 %v801, %v807
    %s809 = scalar_lea.vmem [#allocation1], 16
    %810 = vst [vmem:[%s809] sm:$0xff] %v808
    %s811 = scalar_lea.vmem [#allocation0], 24
    %v812 = vld [vmem:[%s811] sm:$0xff]
    %s813 = scalar_lea.vmem [#allocation1], 24
    %v814 = vld [vmem:[%s813] sm:$0xff]
    %v815 = vmul.f32 %v814, %v775
    %816 = vadd.xlane.f32.xlu0 %v815
    %v817 = vpop.xlane.xlu0 %816
    %v818 = vsub.f32 %v812, %v817
    %v819 = vmul.f32 %v818, %v782
    %v820 = vsel %vm773, %v819, 0.0
    %v821 = vadd.f32 %v814, %v820
    %s822 = scalar_lea.vmem [#allocation1], 24
    %823 = vst [vmem:[%s822] sm:$0xff] %v821
    %s824 = scalar_lea.vmem [#allocation0], 32
    %v825 = vld [vmem:[%s824] sm:$0xff]
    %s826 = scalar_lea.vmem [#allocation1], 32
    %v827 = vld [vmem:[%s826] sm:$0xff]
    %v828 = vmul.f32 %v827, %v775
    %829 = vadd.xlane.f32.xlu0 %v828
    %v830 = vpop.xlane.xlu0 %829
    %v831 = vsub.f32 %v825, %v830
    %v832 = vmul.f32 %v831, %v782
    %v833 = vsel %vm773, %v832, 0.0
    %v834 = vadd.f32 %v827, %v833
    %s835 = scalar_lea.vmem [#allocation1], 32
    %836 = vst [vmem:[%s835] sm:$0xff] %v834
    %vm837 = vcmask 97368
    %s838 = scalar_lea.vmem [#allocation1], 11
    %v839 = vld [vmem:[%s838] ss:$0 sm:$0xff]
    %s840 = scalar_lea.vmem [#allocation0], 11
    %v841 = vld [vmem:[%s840] ss:$0 sm:$0xff]
    %v842 = vmul.f32 %v839, %v839
    %843 = vadd.xlane.f32.xlu0 %v842
    %v844 = vpop.xlane.xlu0 %843
    %v845 = vsub.f32 %v841, %v844
    %v846 = vrsqrt.pop %v845
    %s847 = scalar_lea.vmem [#allocation0], 8
    %v848 = vld [vmem:[%s847] sm:$0xff]
    %s849 = scalar_lea.vmem [#allocation1], 8
    %v850 = vld [vmem:[%s849] sm:$0xff]
    %v851 = vmul.f32 %v850, %v839
    %852 = vadd.xlane.f32.xlu0 %v851
    %v853 = vpop.xlane.xlu0 %852
    %v854 = vsub.f32 %v848, %v853
    %v855 = vmul.f32 %v854, %v846
    %vm856 = vcmask 1047555
    %vm857 = vmand %vm837, %vm856
    %v858 = vsel %vm857, %v855, 0.0
    %v859 = vadd.f32 %v850, %v858
    %s860 = scalar_lea.vmem [#allocation1], 8
    %861 = vst [vmem:[%s860] sm:$0xff] %v859
    %s862 = scalar_lea.vmem [#allocation0], 16
    %v863 = vld [vmem:[%s862] sm:$0xff]
    %s864 = scalar_lea.vmem [#allocation1], 16
    %v865 = vld [vmem:[%s864] sm:$0xff]
    %v866 = vmul.f32 %v865, %v839
    %867 = vadd.xlane.f32.xlu0 %v866
    %v868 = vpop.xlane.xlu0 %867
    %v869 = vsub.f32 %v863, %v868
    %v870 = vmul.f32 %v869, %v846
    %v871 = vsel %vm837, %v870, 0.0
    %v872 = vadd.f32 %v865, %v871
    %s873 = scalar_lea.vmem [#allocation1], 16
    %874 = vst [vmem:[%s873] sm:$0xff] %v872
    %s875 = scalar_lea.vmem [#allocation0], 24
    %v876 = vld [vmem:[%s875] sm:$0xff]
    %s877 = scalar_lea.vmem [#allocation1], 24
    %v878 = vld [vmem:[%s877] sm:$0xff]
    %v879 = vmul.f32 %v878, %v839
    %880 = vadd.xlane.f32.xlu0 %v879
    %v881 = vpop.xlane.xlu0 %880
    %v882 = vsub.f32 %v876, %v881
    %v883 = vmul.f32 %v882, %v846
    %v884 = vsel %vm837, %v883, 0.0
    %v885 = vadd.f32 %v878, %v884
    %s886 = scalar_lea.vmem [#allocation1], 24
    %887 = vst [vmem:[%s886] sm:$0xff] %v885
    %s888 = scalar_lea.vmem [#allocation0], 32
    %v889 = vld [vmem:[%s888] sm:$0xff]
    %s890 = scalar_lea.vmem [#allocation1], 32
    %v891 = vld [vmem:[%s890] sm:$0xff]
    %v892 = vmul.f32 %v891, %v839
    %893 = vadd.xlane.f32.xlu0 %v892
    %v894 = vpop.xlane.xlu0 %893
    %v895 = vsub.f32 %v889, %v894
    %v896 = vmul.f32 %v895, %v846
    %v897 = vsel %vm837, %v896, 0.0
    %v898 = vadd.f32 %v891, %v897
    %s899 = scalar_lea.vmem [#allocation1], 32
    %900 = vst [vmem:[%s899] sm:$0xff] %v898
    %vm901 = vcmask 105568
    %s902 = scalar_lea.vmem [#allocation1], 12
    %v903 = vld [vmem:[%s902] ss:$0 sm:$0xff]
    %s904 = scalar_lea.vmem [#allocation0], 12
    %v905 = vld [vmem:[%s904] ss:$0 sm:$0xff]
    %v906 = vmul.f32 %v903, %v903
    %907 = vadd.xlane.f32.xlu0 %v906
    %v908 = vpop.xlane.xlu0 %907
    %v909 = vsub.f32 %v905, %v908
    %v910 = vrsqrt.pop %v909
    %s911 = scalar_lea.vmem [#allocation0], 8
    %v912 = vld [vmem:[%s911] sm:$0xff]
    %s913 = scalar_lea.vmem [#allocation1], 8
    %v914 = vld [vmem:[%s913] sm:$0xff]
    %v915 = vmul.f32 %v914, %v903
    %916 = vadd.xlane.f32.xlu0 %v915
    %v917 = vpop.xlane.xlu0 %916
    %v918 = vsub.f32 %v912, %v917
    %v919 = vmul.f32 %v918, %v910
    %vm920 = vcmask 1047556
    %vm921 = vmand %vm901, %vm920
    %v922 = vsel %vm921, %v919, 0.0
    %v923 = vadd.f32 %v914, %v922
    %s924 = scalar_lea.vmem [#allocation1], 8
    %925 = vst [vmem:[%s924] sm:$0xff] %v923
    %s926 = scalar_lea.vmem [#allocation0], 16
    %v927 = vld [vmem:[%s926] sm:$0xff]
    %s928 = scalar_lea.vmem [#allocation1], 16
    %v929 = vld [vmem:[%s928] sm:$0xff]
    %v930 = vmul.f32 %v929, %v903
    %931 = vadd.xlane.f32.xlu0 %v930
    %v932 = vpop.xlane.xlu0 %931
    %v933 = vsub.f32 %v927, %v932
    %v934 = vmul.f32 %v933, %v910
    %v935 = vsel %vm901, %v934, 0.0
    %v936 = vadd.f32 %v929, %v935
    %s937 = scalar_lea.vmem [#allocation1], 16
    %938 = vst [vmem:[%s937] sm:$0xff] %v936
    %s939 = scalar_lea.vmem [#allocation0], 24
    %v940 = vld [vmem:[%s939] sm:$0xff]
    %s941 = scalar_lea.vmem [#allocation1], 24
    %v942 = vld [vmem:[%s941] sm:$0xff]
    %v943 = vmul.f32 %v942, %v903
    %944 = vadd.xlane.f32.xlu0 %v943
    %v945 = vpop.xlane.xlu0 %944
    %v946 = vsub.f32 %v940, %v945
    %v947 = vmul.f32 %v946, %v910
    %v948 = vsel %vm901, %v947, 0.0
    %v949 = vadd.f32 %v942, %v948
    %s950 = scalar_lea.vmem [#allocation1], 24
    %951 = vst [vmem:[%s950] sm:$0xff] %v949
    %s952 = scalar_lea.vmem [#allocation0], 32
    %v953 = vld [vmem:[%s952] sm:$0xff]
    %s954 = scalar_lea.vmem [#allocation1], 32
    %v955 = vld [vmem:[%s954] sm:$0xff]
    %v956 = vmul.f32 %v955, %v903
    %957 = vadd.xlane.f32.xlu0 %v956
    %v958 = vpop.xlane.xlu0 %957
    %v959 = vsub.f32 %v953, %v958
    %v960 = vmul.f32 %v959, %v910
    %v961 = vsel %vm901, %v960, 0.0
    %v962 = vadd.f32 %v955, %v961
    %s963 = scalar_lea.vmem [#allocation1], 32
    %964 = vst [vmem:[%s963] sm:$0xff] %v962
    %vm965 = vcmask 113768
    %s966 = scalar_lea.vmem [#allocation1], 13
    %v967 = vld [vmem:[%s966] ss:$0 sm:$0xff]
    %s968 = scalar_lea.vmem [#allocation0], 13
    %v969 = vld [vmem:[%s968] ss:$0 sm:$0xff]
    %v970 = vmul.f32 %v967, %v967
    %971 = vadd.xlane.f32.xlu0 %v970
    %v972 = vpop.xlane.xlu0 %971
    %v973 = vsub.f32 %v969, %v972
    %v974 = vrsqrt.pop %v973
    %s975 = scalar_lea.vmem [#allocation0], 8
    %v976 = vld [vmem:[%s975] sm:$0xff]
    %s977 = scalar_lea.vmem [#allocation1], 8
    %v978 = vld [vmem:[%s977] sm:$0xff]
    %v979 = vmul.f32 %v978, %v967
    %980 = vadd.xlane.f32.xlu0 %v979
    %v981 = vpop.xlane.xlu0 %980
    %v982 = vsub.f32 %v976, %v981
    %v983 = vmul.f32 %v982, %v974
    %vm984 = vcmask 1047557
    %vm985 = vmand %vm965, %vm984
    %v986 = vsel %vm985, %v983, 0.0
    %v987 = vadd.f32 %v978, %v986
    %s988 = scalar_lea.vmem [#allocation1], 8
    %989 = vst [vmem:[%s988] sm:$0xff] %v987
    %s990 = scalar_lea.vmem [#allocation0], 16
    %v991 = vld [vmem:[%s990] sm:$0xff]
    %s992 = scalar_lea.vmem [#allocation1], 16
    %v993 = vld [vmem:[%s992] sm:$0xff]
    %v994 = vmul.f32 %v993, %v967
    %995 = vadd.xlane.f32.xlu0 %v994
    %v996 = vpop.xlane.xlu0 %995
    %v997 = vsub.f32 %v991, %v996
    %v998 = vmul.f32 %v997, %v974
    %v999 = vsel %vm965, %v998, 0.0
    %v1000 = vadd.f32 %v993, %v999
    %s1001 = scalar_lea.vmem [#allocation1], 16
    %1002 = vst [vmem:[%s1001] sm:$0xff] %v1000
    %s1003 = scalar_lea.vmem [#allocation0], 24
    %v1004 = vld [vmem:[%s1003] sm:$0xff]
    %s1005 = scalar_lea.vmem [#allocation1], 24
    %v1006 = vld [vmem:[%s1005] sm:$0xff]
    %v1007 = vmul.f32 %v1006, %v967
    %1008 = vadd.xlane.f32.xlu0 %v1007
    %v1009 = vpop.xlane.xlu0 %1008
    %v1010 = vsub.f32 %v1004, %v1009
    %v1011 = vmul.f32 %v1010, %v974
    %v1012 = vsel %vm965, %v1011, 0.0
    %v1013 = vadd.f32 %v1006, %v1012
    %s1014 = scalar_lea.vmem [#allocation1], 24
    %1015 = vst [vmem:[%s1014] sm:$0xff] %v1013
    %s1016 = scalar_lea.vmem [#allocation0], 32
    %v1017 = vld [vmem:[%s1016] sm:$0xff]
    %s1018 = scalar_lea.vmem [#allocation1], 32
    %v1019 = vld [vmem:[%s1018] sm:$0xff]
    %v1020 = vmul.f32 %v1019, %v967
    %1021 = vadd.xlane.f32.xlu0 %v1020
    %v1022 = vpop.xlane.xlu0 %1021
    %v1023 = vsub.f32 %v1017, %v1022
    %v1024 = vmul.f32 %v1023, %v974
    %v1025 = vsel %vm965, %v1024, 0.0
    %v1026 = vadd.f32 %v1019, %v1025
    %s1027 = scalar_lea.vmem [#allocation1], 32
    %1028 = vst [vmem:[%s1027] sm:$0xff] %v1026
    %vm1029 = vcmask 121968
    %s1030 = scalar_lea.vmem [#allocation1], 14
    %v1031 = vld [vmem:[%s1030] ss:$0 sm:$0xff]
    %s1032 = scalar_lea.vmem [#allocation0], 14
    %v1033 = vld [vmem:[%s1032] ss:$0 sm:$0xff]
    %v1034 = vmul.f32 %v1031, %v1031
    %1035 = vadd.xlane.f32.xlu0 %v1034
    %v1036 = vpop.xlane.xlu0 %1035
    %v1037 = vsub.f32 %v1033, %v1036
    %v1038 = vrsqrt.pop %v1037
    %s1039 = scalar_lea.vmem [#allocation0], 8
    %v1040 = vld [vmem:[%s1039] sm:$0xff]
    %s1041 = scalar_lea.vmem [#allocation1], 8
    %v1042 = vld [vmem:[%s1041] sm:$0xff]
    %v1043 = vmul.f32 %v1042, %v1031
    %1044 = vadd.xlane.f32.xlu0 %v1043
    %v1045 = vpop.xlane.xlu0 %1044
    %v1046 = vsub.f32 %v1040, %v1045
    %v1047 = vmul.f32 %v1046, %v1038
    %vm1048 = vcmask 1047558
    %vm1049 = vmand %vm1029, %vm1048
    %v1050 = vsel %vm1049, %v1047, 0.0
    %v1051 = vadd.f32 %v1042, %v1050
    %s1052 = scalar_lea.vmem [#allocation1], 8
    %1053 = vst [vmem:[%s1052] sm:$0xff] %v1051
    %s1054 = scalar_lea.vmem [#allocation0], 16
    %v1055 = vld [vmem:[%s1054] sm:$0xff]
    %s1056 = scalar_lea.vmem [#allocation1], 16
    %v1057 = vld [vmem:[%s1056] sm:$0xff]
    %v1058 = vmul.f32 %v1057, %v1031
    %1059 = vadd.xlane.f32.xlu0 %v1058
    %v1060 = vpop.xlane.xlu0 %1059
    %v1061 = vsub.f32 %v1055, %v1060
    %v1062 = vmul.f32 %v1061, %v1038
    %v1063 = vsel %vm1029, %v1062, 0.0
    %v1064 = vadd.f32 %v1057, %v1063
    %s1065 = scalar_lea.vmem [#allocation1], 16
    %1066 = vst [vmem:[%s1065] sm:$0xff] %v1064
    %s1067 = scalar_lea.vmem [#allocation0], 24
    %v1068 = vld [vmem:[%s1067] sm:$0xff]
    %s1069 = scalar_lea.vmem [#allocation1], 24
    %v1070 = vld [vmem:[%s1069] sm:$0xff]
    %v1071 = vmul.f32 %v1070, %v1031
    %1072 = vadd.xlane.f32.xlu0 %v1071
    %v1073 = vpop.xlane.xlu0 %1072
    %v1074 = vsub.f32 %v1068, %v1073
    %v1075 = vmul.f32 %v1074, %v1038
    %v1076 = vsel %vm1029, %v1075, 0.0
    %v1077 = vadd.f32 %v1070, %v1076
    %s1078 = scalar_lea.vmem [#allocation1], 24
    %1079 = vst [vmem:[%s1078] sm:$0xff] %v1077
    %s1080 = scalar_lea.vmem [#allocation0], 32
    %v1081 = vld [vmem:[%s1080] sm:$0xff]
    %s1082 = scalar_lea.vmem [#allocation1], 32
    %v1083 = vld [vmem:[%s1082] sm:$0xff]
    %v1084 = vmul.f32 %v1083, %v1031
    %1085 = vadd.xlane.f32.xlu0 %v1084
    %v1086 = vpop.xlane.xlu0 %1085
    %v1087 = vsub.f32 %v1081, %v1086
    %v1088 = vmul.f32 %v1087, %v1038
    %v1089 = vsel %vm1029, %v1088, 0.0
    %v1090 = vadd.f32 %v1083, %v1089
    %s1091 = scalar_lea.vmem [#allocation1], 32
    %1092 = vst [vmem:[%s1091] sm:$0xff] %v1090
    %vm1093 = vcmask 130168
    %s1094 = scalar_lea.vmem [#allocation1], 15
    %v1095 = vld [vmem:[%s1094] ss:$0 sm:$0xff]
    %s1096 = scalar_lea.vmem [#allocation0], 15
    %v1097 = vld [vmem:[%s1096] ss:$0 sm:$0xff]
    %v1098 = vmul.f32 %v1095, %v1095
    %1099 = vadd.xlane.f32.xlu0 %v1098
    %v1100 = vpop.xlane.xlu0 %1099
    %v1101 = vsub.f32 %v1097, %v1100
    %v1102 = vrsqrt.pop %v1101
    %s1103 = scalar_lea.vmem [#allocation0], 8
    %v1104 = vld [vmem:[%s1103] sm:$0xff]
    %s1105 = scalar_lea.vmem [#allocation1], 8
    %v1106 = vld [vmem:[%s1105] sm:$0xff]
    %v1107 = vmul.f32 %v1106, %v1095
    %1108 = vadd.xlane.f32.xlu0 %v1107
    %v1109 = vpop.xlane.xlu0 %1108
    %v1110 = vsub.f32 %v1104, %v1109
    %v1111 = vmul.f32 %v1110, %v1102
    %vm1112 = vcmask 1047559
    %vm1113 = vmand %vm1093, %vm1112
    %v1114 = vsel %vm1113, %v1111, 0.0
    %v1115 = vadd.f32 %v1106, %v1114
    %s1116 = scalar_lea.vmem [#allocation1], 8
    %1117 = vst [vmem:[%s1116] sm:$0xff] %v1115
    %s1118 = scalar_lea.vmem [#allocation0], 16
    %v1119 = vld [vmem:[%s1118] sm:$0xff]
    %s1120 = scalar_lea.vmem [#allocation1], 16
    %v1121 = vld [vmem:[%s1120] sm:$0xff]
    %v1122 = vmul.f32 %v1121, %v1095
    %1123 = vadd.xlane.f32.xlu0 %v1122
    %v1124 = vpop.xlane.xlu0 %1123
    %v1125 = vsub.f32 %v1119, %v1124
    %v1126 = vmul.f32 %v1125, %v1102
    %v1127 = vsel %vm1093, %v1126, 0.0
    %v1128 = vadd.f32 %v1121, %v1127
    %s1129 = scalar_lea.vmem [#allocation1], 16
    %1130 = vst [vmem:[%s1129] sm:$0xff] %v1128
    %s1131 = scalar_lea.vmem [#allocation0], 24
    %v1132 = vld [vmem:[%s1131] sm:$0xff]
    %s1133 = scalar_lea.vmem [#allocation1], 24
    %v1134 = vld [vmem:[%s1133] sm:$0xff]
    %v1135 = vmul.f32 %v1134, %v1095
    %1136 = vadd.xlane.f32.xlu0 %v1135
    %v1137 = vpop.xlane.xlu0 %1136
    %v1138 = vsub.f32 %v1132, %v1137
    %v1139 = vmul.f32 %v1138, %v1102
    %v1140 = vsel %vm1093, %v1139, 0.0
    %v1141 = vadd.f32 %v1134, %v1140
    %s1142 = scalar_lea.vmem [#allocation1], 24
    %1143 = vst [vmem:[%s1142] sm:$0xff] %v1141
    %s1144 = scalar_lea.vmem [#allocation0], 32
    %v1145 = vld [vmem:[%s1144] sm:$0xff]
    %s1146 = scalar_lea.vmem [#allocation1], 32
    %v1147 = vld [vmem:[%s1146] sm:$0xff]
    %v1148 = vmul.f32 %v1147, %v1095
    %1149 = vadd.xlane.f32.xlu0 %v1148
    %v1150 = vpop.xlane.xlu0 %1149
    %v1151 = vsub.f32 %v1145, %v1150
    %v1152 = vmul.f32 %v1151, %v1102
    %v1153 = vsel %vm1093, %v1152, 0.0
    %v1154 = vadd.f32 %v1147, %v1153
    %s1155 = scalar_lea.vmem [#allocation1], 32
    %1156 = vst [vmem:[%s1155] sm:$0xff] %v1154
    %vm1157 = vcmask 138368
    %s1158 = scalar_lea.vmem [#allocation1], 16
    %v1159 = vld [vmem:[%s1158] ss:$0 sm:$0xff]
    %s1160 = scalar_lea.vmem [#allocation0], 16
    %v1161 = vld [vmem:[%s1160] ss:$0 sm:$0xff]
    %v1162 = vmul.f32 %v1159, %v1159
    %1163 = vadd.xlane.f32.xlu0 %v1162
    %v1164 = vpop.xlane.xlu0 %1163
    %v1165 = vsub.f32 %v1161, %v1164
    %v1166 = vrsqrt.pop %v1165
    %s1167 = scalar_lea.vmem [#allocation0], 16
    %v1168 = vld [vmem:[%s1167] sm:$0xff]
    %s1169 = scalar_lea.vmem [#allocation1], 16
    %v1170 = vld [vmem:[%s1169] sm:$0xff]
    %v1171 = vmul.f32 %v1170, %v1159
    %1172 = vadd.xlane.f32.xlu0 %v1171
    %v1173 = vpop.xlane.xlu0 %1172
    %v1174 = vsub.f32 %v1168, %v1173
    %v1175 = vmul.f32 %v1174, %v1166
    %v1176 = vsel %vm1157, %v1175, 0.0
    %v1177 = vadd.f32 %v1170, %v1176
    %s1178 = scalar_lea.vmem [#allocation1], 16
    %1179 = vst [vmem:[%s1178] sm:$0xff] %v1177
    %s1180 = scalar_lea.vmem [#allocation0], 24
    %v1181 = vld [vmem:[%s1180] sm:$0xff]
    %s1182 = scalar_lea.vmem [#allocation1], 24
    %v1183 = vld [vmem:[%s1182] sm:$0xff]
    %v1184 = vmul.f32 %v1183, %v1159
    %1185 = vadd.xlane.f32.xlu0 %v1184
    %v1186 = vpop.xlane.xlu0 %1185
    %v1187 = vsub.f32 %v1181, %v1186
    %v1188 = vmul.f32 %v1187, %v1166
    %v1189 = vsel %vm1157, %v1188, 0.0
    %v1190 = vadd.f32 %v1183, %v1189
    %s1191 = scalar_lea.vmem [#allocation1], 24
    %1192 = vst [vmem:[%s1191] sm:$0xff] %v1190
    %s1193 = scalar_lea.vmem [#allocation0], 32
    %v1194 = vld [vmem:[%s1193] sm:$0xff]
    %s1195 = scalar_lea.vmem [#allocation1], 32
    %v1196 = vld [vmem:[%s1195] sm:$0xff]
    %v1197 = vmul.f32 %v1196, %v1159
    %1198 = vadd.xlane.f32.xlu0 %v1197
    %v1199 = vpop.xlane.xlu0 %1198
    %v1200 = vsub.f32 %v1194, %v1199
    %v1201 = vmul.f32 %v1200, %v1166
    %v1202 = vsel %vm1157, %v1201, 0.0
    %v1203 = vadd.f32 %v1196, %v1202
    %s1204 = scalar_lea.vmem [#allocation1], 32
    %1205 = vst [vmem:[%s1204] sm:$0xff] %v1203
    %vm1206 = vcmask 146568
    %s1207 = scalar_lea.vmem [#allocation1], 17
    %v1208 = vld [vmem:[%s1207] ss:$0 sm:$0xff]
    %s1209 = scalar_lea.vmem [#allocation0], 17
    %v1210 = vld [vmem:[%s1209] ss:$0 sm:$0xff]
    %v1211 = vmul.f32 %v1208, %v1208
    %1212 = vadd.xlane.f32.xlu0 %v1211
    %v1213 = vpop.xlane.xlu0 %1212
    %v1214 = vsub.f32 %v1210, %v1213
    %v1215 = vrsqrt.pop %v1214
    %s1216 = scalar_lea.vmem [#allocation0], 16
    %v1217 = vld [vmem:[%s1216] sm:$0xff]
    %s1218 = scalar_lea.vmem [#allocation1], 16
    %v1219 = vld [vmem:[%s1218] sm:$0xff]
    %v1220 = vmul.f32 %v1219, %v1208
    %1221 = vadd.xlane.f32.xlu0 %v1220
    %v1222 = vpop.xlane.xlu0 %1221
    %v1223 = vsub.f32 %v1217, %v1222
    %v1224 = vmul.f32 %v1223, %v1215
    %vm1225 = vcmask 1047553
    %vm1226 = vmand %vm1206, %vm1225
    %v1227 = vsel %vm1226, %v1224, 0.0
    %v1228 = vadd.f32 %v1219, %v1227
    %s1229 = scalar_lea.vmem [#allocation1], 16
    %1230 = vst [vmem:[%s1229] sm:$0xff] %v1228
    %s1231 = scalar_lea.vmem [#allocation0], 24
    %v1232 = vld [vmem:[%s1231] sm:$0xff]
    %s1233 = scalar_lea.vmem [#allocation1], 24
    %v1234 = vld [vmem:[%s1233] sm:$0xff]
    %v1235 = vmul.f32 %v1234, %v1208
    %1236 = vadd.xlane.f32.xlu0 %v1235
    %v1237 = vpop.xlane.xlu0 %1236
    %v1238 = vsub.f32 %v1232, %v1237
    %v1239 = vmul.f32 %v1238, %v1215
    %v1240 = vsel %vm1206, %v1239, 0.0
    %v1241 = vadd.f32 %v1234, %v1240
    %s1242 = scalar_lea.vmem [#allocation1], 24
    %1243 = vst [vmem:[%s1242] sm:$0xff] %v1241
    %s1244 = scalar_lea.vmem [#allocation0], 32
    %v1245 = vld [vmem:[%s1244] sm:$0xff]
    %s1246 = scalar_lea.vmem [#allocation1], 32
    %v1247 = vld [vmem:[%s1246] sm:$0xff]
    %v1248 = vmul.f32 %v1247, %v1208
    %1249 = vadd.xlane.f32.xlu0 %v1248
    %v1250 = vpop.xlane.xlu0 %1249
    %v1251 = vsub.f32 %v1245, %v1250
    %v1252 = vmul.f32 %v1251, %v1215
    %v1253 = vsel %vm1206, %v1252, 0.0
    %v1254 = vadd.f32 %v1247, %v1253
    %s1255 = scalar_lea.vmem [#allocation1], 32
    %1256 = vst [vmem:[%s1255] sm:$0xff] %v1254
    %vm1257 = vcmask 154768
    %s1258 = scalar_lea.vmem [#allocation1], 18
    %v1259 = vld [vmem:[%s1258] ss:$0 sm:$0xff]
    %s1260 = scalar_lea.vmem [#allocation0], 18
    %v1261 = vld [vmem:[%s1260] ss:$0 sm:$0xff]
    %v1262 = vmul.f32 %v1259, %v1259
    %1263 = vadd.xlane.f32.xlu0 %v1262
    %v1264 = vpop.xlane.xlu0 %1263
    %v1265 = vsub.f32 %v1261, %v1264
    %v1266 = vrsqrt.pop %v1265
    %s1267 = scalar_lea.vmem [#allocation0], 16
    %v1268 = vld [vmem:[%s1267] sm:$0xff]
    %s1269 = scalar_lea.vmem [#allocation1], 16
    %v1270 = vld [vmem:[%s1269] sm:$0xff]
    %v1271 = vmul.f32 %v1270, %v1259
    %1272 = vadd.xlane.f32.xlu0 %v1271
    %v1273 = vpop.xlane.xlu0 %1272
    %v1274 = vsub.f32 %v1268, %v1273
    %v1275 = vmul.f32 %v1274, %v1266
    %vm1276 = vcmask 1047554
    %vm1277 = vmand %vm1257, %vm1276
    %v1278 = vsel %vm1277, %v1275, 0.0
    %v1279 = vadd.f32 %v1270, %v1278
    %s1280 = scalar_lea.vmem [#allocation1], 16
    %1281 = vst [vmem:[%s1280] sm:$0xff] %v1279
    %s1282 = scalar_lea.vmem [#allocation0], 24
    %v1283 = vld [vmem:[%s1282] sm:$0xff]
    %s1284 = scalar_lea.vmem [#allocation1], 24
    %v1285 = vld [vmem:[%s1284] sm:$0xff]
    %v1286 = vmul.f32 %v1285, %v1259
    %1287 = vadd.xlane.f32.xlu0 %v1286
    %v1288 = vpop.xlane.xlu0 %1287
    %v1289 = vsub.f32 %v1283, %v1288
    %v1290 = vmul.f32 %v1289, %v1266
    %v1291 = vsel %vm1257, %v1290, 0.0
    %v1292 = vadd.f32 %v1285, %v1291
    %s1293 = scalar_lea.vmem [#allocation1], 24
    %1294 = vst [vmem:[%s1293] sm:$0xff] %v1292
    %s1295 = scalar_lea.vmem [#allocation0], 32
    %v1296 = vld [vmem:[%s1295] sm:$0xff]
    %s1297 = scalar_lea.vmem [#allocation1], 32
    %v1298 = vld [vmem:[%s1297] sm:$0xff]
    %v1299 = vmul.f32 %v1298, %v1259
    %1300 = vadd.xlane.f32.xlu0 %v1299
    %v1301 = vpop.xlane.xlu0 %1300
    %v1302 = vsub.f32 %v1296, %v1301
    %v1303 = vmul.f32 %v1302, %v1266
    %v1304 = vsel %vm1257, %v1303, 0.0
    %v1305 = vadd.f32 %v1298, %v1304
    %s1306 = scalar_lea.vmem [#allocation1], 32
    %1307 = vst [vmem:[%s1306] sm:$0xff] %v1305
    %vm1308 = vcmask 162968
    %s1309 = scalar_lea.vmem [#allocation1], 19
    %v1310 = vld [vmem:[%s1309] ss:$0 sm:$0xff]
    %s1311 = scalar_lea.vmem [#allocation0], 19
    %v1312 = vld [vmem:[%s1311] ss:$0 sm:$0xff]
    %v1313 = vmul.f32 %v1310, %v1310
    %1314 = vadd.xlane.f32.xlu0 %v1313
    %v1315 = vpop.xlane.xlu0 %1314
    %v1316 = vsub.f32 %v1312, %v1315
    %v1317 = vrsqrt.pop %v1316
    %s1318 = scalar_lea.vmem [#allocation0], 16
    %v1319 = vld [vmem:[%s1318] sm:$0xff]
    %s1320 = scalar_lea.vmem [#allocation1], 16
    %v1321 = vld [vmem:[%s1320] sm:$0xff]
    %v1322 = vmul.f32 %v1321, %v1310
    %1323 = vadd.xlane.f32.xlu0 %v1322
    %v1324 = vpop.xlane.xlu0 %1323
    %v1325 = vsub.f32 %v1319, %v1324
    %v1326 = vmul.f32 %v1325, %v1317
    %vm1327 = vcmask 1047555
    %vm1328 = vmand %vm1308, %vm1327
    %v1329 = vsel %vm1328, %v1326, 0.0
    %v1330 = vadd.f32 %v1321, %v1329
    %s1331 = scalar_lea.vmem [#allocation1], 16
    %1332 = vst [vmem:[%s1331] sm:$0xff] %v1330
    %s1333 = scalar_lea.vmem [#allocation0], 24
    %v1334 = vld [vmem:[%s1333] sm:$0xff]
    %s1335 = scalar_lea.vmem [#allocation1], 24
    %v1336 = vld [vmem:[%s1335] sm:$0xff]
    %v1337 = vmul.f32 %v1336, %v1310
    %1338 = vadd.xlane.f32.xlu0 %v1337
    %v1339 = vpop.xlane.xlu0 %1338
    %v1340 = vsub.f32 %v1334, %v1339
    %v1341 = vmul.f32 %v1340, %v1317
    %v1342 = vsel %vm1308, %v1341, 0.0
    %v1343 = vadd.f32 %v1336, %v1342
    %s1344 = scalar_lea.vmem [#allocation1], 24
    %1345 = vst [vmem:[%s1344] sm:$0xff] %v1343
    %s1346 = scalar_lea.vmem [#allocation0], 32
    %v1347 = vld [vmem:[%s1346] sm:$0xff]
    %s1348 = scalar_lea.vmem [#allocation1], 32
    %v1349 = vld [vmem:[%s1348] sm:$0xff]
    %v1350 = vmul.f32 %v1349, %v1310
    %1351 = vadd.xlane.f32.xlu0 %v1350
    %v1352 = vpop.xlane.xlu0 %1351
    %v1353 = vsub.f32 %v1347, %v1352
    %v1354 = vmul.f32 %v1353, %v1317
    %v1355 = vsel %vm1308, %v1354, 0.0
    %v1356 = vadd.f32 %v1349, %v1355
    %s1357 = scalar_lea.vmem [#allocation1], 32
    %1358 = vst [vmem:[%s1357] sm:$0xff] %v1356
    %vm1359 = vcmask 171168
    %s1360 = scalar_lea.vmem [#allocation1], 20
    %v1361 = vld [vmem:[%s1360] ss:$0 sm:$0xff]
    %s1362 = scalar_lea.vmem [#allocation0], 20
    %v1363 = vld [vmem:[%s1362] ss:$0 sm:$0xff]
    %v1364 = vmul.f32 %v1361, %v1361
    %1365 = vadd.xlane.f32.xlu0 %v1364
    %v1366 = vpop.xlane.xlu0 %1365
    %v1367 = vsub.f32 %v1363, %v1366
    %v1368 = vrsqrt.pop %v1367
    %s1369 = scalar_lea.vmem [#allocation0], 16
    %v1370 = vld [vmem:[%s1369] sm:$0xff]
    %s1371 = scalar_lea.vmem [#allocation1], 16
    %v1372 = vld [vmem:[%s1371] sm:$0xff]
    %v1373 = vmul.f32 %v1372, %v1361
    %1374 = vadd.xlane.f32.xlu0 %v1373
    %v1375 = vpop.xlane.xlu0 %1374
    %v1376 = vsub.f32 %v1370, %v1375
    %v1377 = vmul.f32 %v1376, %v1368
    %vm1378 = vcmask 1047556
    %vm1379 = vmand %vm1359, %vm1378
    %v1380 = vsel %vm1379, %v1377, 0.0
    %v1381 = vadd.f32 %v1372, %v1380
    %s1382 = scalar_lea.vmem [#allocation1], 16
    %1383 = vst [vmem:[%s1382] sm:$0xff] %v1381
    %s1384 = scalar_lea.vmem [#allocation0], 24
    %v1385 = vld [vmem:[%s1384] sm:$0xff]
    %s1386 = scalar_lea.vmem [#allocation1], 24
    %v1387 = vld [vmem:[%s1386] sm:$0xff]
    %v1388 = vmul.f32 %v1387, %v1361
    %1389 = vadd.xlane.f32.xlu0 %v1388
    %v1390 = vpop.xlane.xlu0 %1389
    %v1391 = vsub.f32 %v1385, %v1390
    %v1392 = vmul.f32 %v1391, %v1368
    %v1393 = vsel %vm1359, %v1392, 0.0
    %v1394 = vadd.f32 %v1387, %v1393
    %s1395 = scalar_lea.vmem [#allocation1], 24
    %1396 = vst [vmem:[%s1395] sm:$0xff] %v1394
    %s1397 = scalar_lea.vmem [#allocation0], 32
    %v1398 = vld [vmem:[%s1397] sm:$0xff]
    %s1399 = scalar_lea.vmem [#allocation1], 32
    %v1400 = vld [vmem:[%s1399] sm:$0xff]
    %v1401 = vmul.f32 %v1400, %v1361
    %1402 = vadd.xlane.f32.xlu0 %v1401
    %v1403 = vpop.xlane.xlu0 %1402
    %v1404 = vsub.f32 %v1398, %v1403
    %v1405 = vmul.f32 %v1404, %v1368
    %v1406 = vsel %vm1359, %v1405, 0.0
    %v1407 = vadd.f32 %v1400, %v1406
    %s1408 = scalar_lea.vmem [#allocation1], 32
    %1409 = vst [vmem:[%s1408] sm:$0xff] %v1407
    %vm1410 = vcmask 179368
    %s1411 = scalar_lea.vmem [#allocation1], 21
    %v1412 = vld [vmem:[%s1411] ss:$0 sm:$0xff]
    %s1413 = scalar_lea.vmem [#allocation0], 21
    %v1414 = vld [vmem:[%s1413] ss:$0 sm:$0xff]
    %v1415 = vmul.f32 %v1412, %v1412
    %1416 = vadd.xlane.f32.xlu0 %v1415
    %v1417 = vpop.xlane.xlu0 %1416
    %v1418 = vsub.f32 %v1414, %v1417
    %v1419 = vrsqrt.pop %v1418
    %s1420 = scalar_lea.vmem [#allocation0], 16
    %v1421 = vld [vmem:[%s1420] sm:$0xff]
    %s1422 = scalar_lea.vmem [#allocation1], 16
    %v1423 = vld [vmem:[%s1422] sm:$0xff]
    %v1424 = vmul.f32 %v1423, %v1412
    %1425 = vadd.xlane.f32.xlu0 %v1424
    %v1426 = vpop.xlane.xlu0 %1425
    %v1427 = vsub.f32 %v1421, %v1426
    %v1428 = vmul.f32 %v1427, %v1419
    %vm1429 = vcmask 1047557
    %vm1430 = vmand %vm1410, %vm1429
    %v1431 = vsel %vm1430, %v1428, 0.0
    %v1432 = vadd.f32 %v1423, %v1431
    %s1433 = scalar_lea.vmem [#allocation1], 16
    %1434 = vst [vmem:[%s1433] sm:$0xff] %v1432
    %s1435 = scalar_lea.vmem [#allocation0], 24
    %v1436 = vld [vmem:[%s1435] sm:$0xff]
    %s1437 = scalar_lea.vmem [#allocation1], 24
    %v1438 = vld [vmem:[%s1437] sm:$0xff]
    %v1439 = vmul.f32 %v1438, %v1412
    %1440 = vadd.xlane.f32.xlu0 %v1439
    %v1441 = vpop.xlane.xlu0 %1440
    %v1442 = vsub.f32 %v1436, %v1441
    %v1443 = vmul.f32 %v1442, %v1419
    %v1444 = vsel %vm1410, %v1443, 0.0
    %v1445 = vadd.f32 %v1438, %v1444
    %s1446 = scalar_lea.vmem [#allocation1], 24
    %1447 = vst [vmem:[%s1446] sm:$0xff] %v1445
    %s1448 = scalar_lea.vmem [#allocation0], 32
    %v1449 = vld [vmem:[%s1448] sm:$0xff]
    %s1450 = scalar_lea.vmem [#allocation1], 32
    %v1451 = vld [vmem:[%s1450] sm:$0xff]
    %v1452 = vmul.f32 %v1451, %v1412
    %1453 = vadd.xlane.f32.xlu0 %v1452
    %v1454 = vpop.xlane.xlu0 %1453
    %v1455 = vsub.f32 %v1449, %v1454
    %v1456 = vmul.f32 %v1455, %v1419
    %v1457 = vsel %vm1410, %v1456, 0.0
    %v1458 = vadd.f32 %v1451, %v1457
    %s1459 = scalar_lea.vmem [#allocation1], 32
    %1460 = vst [vmem:[%s1459] sm:$0xff] %v1458
    %vm1461 = vcmask 187568
    %s1462 = scalar_lea.vmem [#allocation1], 22
    %v1463 = vld [vmem:[%s1462] ss:$0 sm:$0xff]
    %s1464 = scalar_lea.vmem [#allocation0], 22
    %v1465 = vld [vmem:[%s1464] ss:$0 sm:$0xff]
    %v1466 = vmul.f32 %v1463, %v1463
    %1467 = vadd.xlane.f32.xlu0 %v1466
    %v1468 = vpop.xlane.xlu0 %1467
    %v1469 = vsub.f32 %v1465, %v1468
    %v1470 = vrsqrt.pop %v1469
    %s1471 = scalar_lea.vmem [#allocation0], 16
    %v1472 = vld [vmem:[%s1471] sm:$0xff]
    %s1473 = scalar_lea.vmem [#allocation1], 16
    %v1474 = vld [vmem:[%s1473] sm:$0xff]
    %v1475 = vmul.f32 %v1474, %v1463
    %1476 = vadd.xlane.f32.xlu0 %v1475
    %v1477 = vpop.xlane.xlu0 %1476
    %v1478 = vsub.f32 %v1472, %v1477
    %v1479 = vmul.f32 %v1478, %v1470
    %vm1480 = vcmask 1047558
    %vm1481 = vmand %vm1461, %vm1480
    %v1482 = vsel %vm1481, %v1479, 0.0
    %v1483 = vadd.f32 %v1474, %v1482
    %s1484 = scalar_lea.vmem [#allocation1], 16
    %1485 = vst [vmem:[%s1484] sm:$0xff] %v1483
    %s1486 = scalar_lea.vmem [#allocation0], 24
    %v1487 = vld [vmem:[%s1486] sm:$0xff]
    %s1488 = scalar_lea.vmem [#allocation1], 24
    %v1489 = vld [vmem:[%s1488] sm:$0xff]
    %v1490 = vmul.f32 %v1489, %v1463
    %1491 = vadd.xlane.f32.xlu0 %v1490
    %v1492 = vpop.xlane.xlu0 %1491
    %v1493 = vsub.f32 %v1487, %v1492
    %v1494 = vmul.f32 %v1493, %v1470
    %v1495 = vsel %vm1461, %v1494, 0.0
    %v1496 = vadd.f32 %v1489, %v1495
    %s1497 = scalar_lea.vmem [#allocation1], 24
    %1498 = vst [vmem:[%s1497] sm:$0xff] %v1496
    %s1499 = scalar_lea.vmem [#allocation0], 32
    %v1500 = vld [vmem:[%s1499] sm:$0xff]
    %s1501 = scalar_lea.vmem [#allocation1], 32
    %v1502 = vld [vmem:[%s1501] sm:$0xff]
    %v1503 = vmul.f32 %v1502, %v1463
    %1504 = vadd.xlane.f32.xlu0 %v1503
    %v1505 = vpop.xlane.xlu0 %1504
    %v1506 = vsub.f32 %v1500, %v1505
    %v1507 = vmul.f32 %v1506, %v1470
    %v1508 = vsel %vm1461, %v1507, 0.0
    %v1509 = vadd.f32 %v1502, %v1508
    %s1510 = scalar_lea.vmem [#allocation1], 32
    %1511 = vst [vmem:[%s1510] sm:$0xff] %v1509
    %vm1512 = vcmask 195768
    %s1513 = scalar_lea.vmem [#allocation1], 23
    %v1514 = vld [vmem:[%s1513] ss:$0 sm:$0xff]
    %s1515 = scalar_lea.vmem [#allocation0], 23
    %v1516 = vld [vmem:[%s1515] ss:$0 sm:$0xff]
    %v1517 = vmul.f32 %v1514, %v1514
    %1518 = vadd.xlane.f32.xlu0 %v1517
    %v1519 = vpop.xlane.xlu0 %1518
    %v1520 = vsub.f32 %v1516, %v1519
    %v1521 = vrsqrt.pop %v1520
    %s1522 = scalar_lea.vmem [#allocation0], 16
    %v1523 = vld [vmem:[%s1522] sm:$0xff]
    %s1524 = scalar_lea.vmem [#allocation1], 16
    %v1525 = vld [vmem:[%s1524] sm:$0xff]
    %v1526 = vmul.f32 %v1525, %v1514
    %1527 = vadd.xlane.f32.xlu0 %v1526
    %v1528 = vpop.xlane.xlu0 %1527
    %v1529 = vsub.f32 %v1523, %v1528
    %v1530 = vmul.f32 %v1529, %v1521
    %vm1531 = vcmask 1047559
    %vm1532 = vmand %vm1512, %vm1531
    %v1533 = vsel %vm1532, %v1530, 0.0
    %v1534 = vadd.f32 %v1525, %v1533
    %s1535 = scalar_lea.vmem [#allocation1], 16
    %1536 = vst [vmem:[%s1535] sm:$0xff] %v1534
    %s1537 = scalar_lea.vmem [#allocation0], 24
    %v1538 = vld [vmem:[%s1537] sm:$0xff]
    %s1539 = scalar_lea.vmem [#allocation1], 24
    %v1540 = vld [vmem:[%s1539] sm:$0xff]
    %v1541 = vmul.f32 %v1540, %v1514
    %1542 = vadd.xlane.f32.xlu0 %v1541
    %v1543 = vpop.xlane.xlu0 %1542
    %v1544 = vsub.f32 %v1538, %v1543
    %v1545 = vmul.f32 %v1544, %v1521
    %v1546 = vsel %vm1512, %v1545, 0.0
    %v1547 = vadd.f32 %v1540, %v1546
    %s1548 = scalar_lea.vmem [#allocation1], 24
    %1549 = vst [vmem:[%s1548] sm:$0xff] %v1547
    %s1550 = scalar_lea.vmem [#allocation0], 32
    %v1551 = vld [vmem:[%s1550] sm:$0xff]
    %s1552 = scalar_lea.vmem [#allocation1], 32
    %v1553 = vld [vmem:[%s1552] sm:$0xff]
    %v1554 = vmul.f32 %v1553, %v1514
    %1555 = vadd.xlane.f32.xlu0 %v1554
    %v1556 = vpop.xlane.xlu0 %1555
    %v1557 = vsub.f32 %v1551, %v1556
    %v1558 = vmul.f32 %v1557, %v1521
    %v1559 = vsel %vm1512, %v1558, 0.0
    %v1560 = vadd.f32 %v1553, %v1559
    %s1561 = scalar_lea.vmem [#allocation1], 32
    %1562 = vst [vmem:[%s1561] sm:$0xff] %v1560
    %vm1563 = vcmask 203968
    %s1564 = scalar_lea.vmem [#allocation1], 24
    %v1565 = vld [vmem:[%s1564] ss:$0 sm:$0xff]
    %s1566 = scalar_lea.vmem [#allocation0], 24
    %v1567 = vld [vmem:[%s1566] ss:$0 sm:$0xff]
    %v1568 = vmul.f32 %v1565, %v1565
    %1569 = vadd.xlane.f32.xlu0 %v1568
    %v1570 = vpop.xlane.xlu0 %1569
    %v1571 = vsub.f32 %v1567, %v1570
    %v1572 = vrsqrt.pop %v1571
    %s1573 = scalar_lea.vmem [#allocation0], 24
    %v1574 = vld [vmem:[%s1573] sm:$0xff]
    %s1575 = scalar_lea.vmem [#allocation1], 24
    %v1576 = vld [vmem:[%s1575] sm:$0xff]
    %v1577 = vmul.f32 %v1576, %v1565
    %1578 = vadd.xlane.f32.xlu0 %v1577
    %v1579 = vpop.xlane.xlu0 %1578
    %v1580 = vsub.f32 %v1574, %v1579
    %v1581 = vmul.f32 %v1580, %v1572
    %v1582 = vsel %vm1563, %v1581, 0.0
    %v1583 = vadd.f32 %v1576, %v1582
    %s1584 = scalar_lea.vmem [#allocation1], 24
    %1585 = vst [vmem:[%s1584] sm:$0xff] %v1583
    %s1586 = scalar_lea.vmem [#allocation0], 32
    %v1587 = vld [vmem:[%s1586] sm:$0xff]
    %s1588 = scalar_lea.vmem [#allocation1], 32
    %v1589 = vld [vmem:[%s1588] sm:$0xff]
    %v1590 = vmul.f32 %v1589, %v1565
    %1591 = vadd.xlane.f32.xlu0 %v1590
    %v1592 = vpop.xlane.xlu0 %1591
    %v1593 = vsub.f32 %v1587, %v1592
    %v1594 = vmul.f32 %v1593, %v1572
    %v1595 = vsel %vm1563, %v1594, 0.0
    %v1596 = vadd.f32 %v1589, %v1595
    %s1597 = scalar_lea.vmem [#allocation1], 32
    %1598 = vst [vmem:[%s1597] sm:$0xff] %v1596
    %vm1599 = vcmask 212168
    %s1600 = scalar_lea.vmem [#allocation1], 25
    %v1601 = vld [vmem:[%s1600] ss:$0 sm:$0xff]
    %s1602 = scalar_lea.vmem [#allocation0], 25
    %v1603 = vld [vmem:[%s1602] ss:$0 sm:$0xff]
    %v1604 = vmul.f32 %v1601, %v1601
    %1605 = vadd.xlane.f32.xlu0 %v1604
    %v1606 = vpop.xlane.xlu0 %1605
    %v1607 = vsub.f32 %v1603, %v1606
    %v1608 = vrsqrt.pop %v1607
    %s1609 = scalar_lea.vmem [#allocation0], 24
    %v1610 = vld [vmem:[%s1609] sm:$0xff]
    %s1611 = scalar_lea.vmem [#allocation1], 24
    %v1612 = vld [vmem:[%s1611] sm:$0xff]
    %v1613 = vmul.f32 %v1612, %v1601
    %1614 = vadd.xlane.f32.xlu0 %v1613
    %v1615 = vpop.xlane.xlu0 %1614
    %v1616 = vsub.f32 %v1610, %v1615
    %v1617 = vmul.f32 %v1616, %v1608
    %vm1618 = vcmask 1047553
    %vm1619 = vmand %vm1599, %vm1618
    %v1620 = vsel %vm1619, %v1617, 0.0
    %v1621 = vadd.f32 %v1612, %v1620
    %s1622 = scalar_lea.vmem [#allocation1], 24
    %1623 = vst [vmem:[%s1622] sm:$0xff] %v1621
    %s1624 = scalar_lea.vmem [#allocation0], 32
    %v1625 = vld [vmem:[%s1624] sm:$0xff]
    %s1626 = scalar_lea.vmem [#allocation1], 32
    %v1627 = vld [vmem:[%s1626] sm:$0xff]
    %v1628 = vmul.f32 %v1627, %v1601
    %1629 = vadd.xlane.f32.xlu0 %v1628
    %v1630 = vpop.xlane.xlu0 %1629
    %v1631 = vsub.f32 %v1625, %v1630
    %v1632 = vmul.f32 %v1631, %v1608
    %v1633 = vsel %vm1599, %v1632, 0.0
    %v1634 = vadd.f32 %v1627, %v1633
    %s1635 = scalar_lea.vmem [#allocation1], 32
    %1636 = vst [vmem:[%s1635] sm:$0xff] %v1634
    %vm1637 = vcmask 220368
    %s1638 = scalar_lea.vmem [#allocation1], 26
    %v1639 = vld [vmem:[%s1638] ss:$0 sm:$0xff]
    %s1640 = scalar_lea.vmem [#allocation0], 26
    %v1641 = vld [vmem:[%s1640] ss:$0 sm:$0xff]
    %v1642 = vmul.f32 %v1639, %v1639
    %1643 = vadd.xlane.f32.xlu0 %v1642
    %v1644 = vpop.xlane.xlu0 %1643
    %v1645 = vsub.f32 %v1641, %v1644
    %v1646 = vrsqrt.pop %v1645
    %s1647 = scalar_lea.vmem [#allocation0], 24
    %v1648 = vld [vmem:[%s1647] sm:$0xff]
    %s1649 = scalar_lea.vmem [#allocation1], 24
    %v1650 = vld [vmem:[%s1649] sm:$0xff]
    %v1651 = vmul.f32 %v1650, %v1639
    %1652 = vadd.xlane.f32.xlu0 %v1651
    %v1653 = vpop.xlane.xlu0 %1652
    %v1654 = vsub.f32 %v1648, %v1653
    %v1655 = vmul.f32 %v1654, %v1646
    %vm1656 = vcmask 1047554
    %vm1657 = vmand %vm1637, %vm1656
    %v1658 = vsel %vm1657, %v1655, 0.0
    %v1659 = vadd.f32 %v1650, %v1658
    %s1660 = scalar_lea.vmem [#allocation1], 24
    %1661 = vst [vmem:[%s1660] sm:$0xff] %v1659
    %s1662 = scalar_lea.vmem [#allocation0], 32
    %v1663 = vld [vmem:[%s1662] sm:$0xff]
    %s1664 = scalar_lea.vmem [#allocation1], 32
    %v1665 = vld [vmem:[%s1664] sm:$0xff]
    %v1666 = vmul.f32 %v1665, %v1639
    %1667 = vadd.xlane.f32.xlu0 %v1666
    %v1668 = vpop.xlane.xlu0 %1667
    %v1669 = vsub.f32 %v1663, %v1668
    %v1670 = vmul.f32 %v1669, %v1646
    %v1671 = vsel %vm1637, %v1670, 0.0
    %v1672 = vadd.f32 %v1665, %v1671
    %s1673 = scalar_lea.vmem [#allocation1], 32
    %1674 = vst [vmem:[%s1673] sm:$0xff] %v1672
    %vm1675 = vcmask 228568
    %s1676 = scalar_lea.vmem [#allocation1], 27
    %v1677 = vld [vmem:[%s1676] ss:$0 sm:$0xff]
    %s1678 = scalar_lea.vmem [#allocation0], 27
    %v1679 = vld [vmem:[%s1678] ss:$0 sm:$0xff]
    %v1680 = vmul.f32 %v1677, %v1677
    %1681 = vadd.xlane.f32.xlu0 %v1680
    %v1682 = vpop.xlane.xlu0 %1681
    %v1683 = vsub.f32 %v1679, %v1682
    %v1684 = vrsqrt.pop %v1683
    %s1685 = scalar_lea.vmem [#allocation0], 24
    %v1686 = vld [vmem:[%s1685] sm:$0xff]
    %s1687 = scalar_lea.vmem [#allocation1], 24
    %v1688 = vld [vmem:[%s1687] sm:$0xff]
    %v1689 = vmul.f32 %v1688, %v1677
    %1690 = vadd.xlane.f32.xlu0 %v1689
    %v1691 = vpop.xlane.xlu0 %1690
    %v1692 = vsub.f32 %v1686, %v1691
    %v1693 = vmul.f32 %v1692, %v1684
    %vm1694 = vcmask 1047555
    %vm1695 = vmand %vm1675, %vm1694
    %v1696 = vsel %vm1695, %v1693, 0.0
    %v1697 = vadd.f32 %v1688, %v1696
    %s1698 = scalar_lea.vmem [#allocation1], 24
    %1699 = vst [vmem:[%s1698] sm:$0xff] %v1697
    %s1700 = scalar_lea.vmem [#allocation0], 32
    %v1701 = vld [vmem:[%s1700] sm:$0xff]
    %s1702 = scalar_lea.vmem [#allocation1], 32
    %v1703 = vld [vmem:[%s1702] sm:$0xff]
    %v1704 = vmul.f32 %v1703, %v1677
    %1705 = vadd.xlane.f32.xlu0 %v1704
    %v1706 = vpop.xlane.xlu0 %1705
    %v1707 = vsub.f32 %v1701, %v1706
    %v1708 = vmul.f32 %v1707, %v1684
    %v1709 = vsel %vm1675, %v1708, 0.0
    %v1710 = vadd.f32 %v1703, %v1709
    %s1711 = scalar_lea.vmem [#allocation1], 32
    %1712 = vst [vmem:[%s1711] sm:$0xff] %v1710
    %vm1713 = vcmask 236768
    %s1714 = scalar_lea.vmem [#allocation1], 28
    %v1715 = vld [vmem:[%s1714] ss:$0 sm:$0xff]
    %s1716 = scalar_lea.vmem [#allocation0], 28
    %v1717 = vld [vmem:[%s1716] ss:$0 sm:$0xff]
    %v1718 = vmul.f32 %v1715, %v1715
    %1719 = vadd.xlane.f32.xlu0 %v1718
    %v1720 = vpop.xlane.xlu0 %1719
    %v1721 = vsub.f32 %v1717, %v1720
    %v1722 = vrsqrt.pop %v1721
    %s1723 = scalar_lea.vmem [#allocation0], 24
    %v1724 = vld [vmem:[%s1723] sm:$0xff]
    %s1725 = scalar_lea.vmem [#allocation1], 24
    %v1726 = vld [vmem:[%s1725] sm:$0xff]
    %v1727 = vmul.f32 %v1726, %v1715
    %1728 = vadd.xlane.f32.xlu0 %v1727
    %v1729 = vpop.xlane.xlu0 %1728
    %v1730 = vsub.f32 %v1724, %v1729
    %v1731 = vmul.f32 %v1730, %v1722
    %vm1732 = vcmask 1047556
    %vm1733 = vmand %vm1713, %vm1732
    %v1734 = vsel %vm1733, %v1731, 0.0
    %v1735 = vadd.f32 %v1726, %v1734
    %s1736 = scalar_lea.vmem [#allocation1], 24
    %1737 = vst [vmem:[%s1736] sm:$0xff] %v1735
    %s1738 = scalar_lea.vmem [#allocation0], 32
    %v1739 = vld [vmem:[%s1738] sm:$0xff]
    %s1740 = scalar_lea.vmem [#allocation1], 32
    %v1741 = vld [vmem:[%s1740] sm:$0xff]
    %v1742 = vmul.f32 %v1741, %v1715
    %1743 = vadd.xlane.f32.xlu0 %v1742
    %v1744 = vpop.xlane.xlu0 %1743
    %v1745 = vsub.f32 %v1739, %v1744
    %v1746 = vmul.f32 %v1745, %v1722
    %v1747 = vsel %vm1713, %v1746, 0.0
    %v1748 = vadd.f32 %v1741, %v1747
    %s1749 = scalar_lea.vmem [#allocation1], 32
    %1750 = vst [vmem:[%s1749] sm:$0xff] %v1748
    %vm1751 = vcmask 244968
    %s1752 = scalar_lea.vmem [#allocation1], 29
    %v1753 = vld [vmem:[%s1752] ss:$0 sm:$0xff]
    %s1754 = scalar_lea.vmem [#allocation0], 29
    %v1755 = vld [vmem:[%s1754] ss:$0 sm:$0xff]
    %v1756 = vmul.f32 %v1753, %v1753
    %1757 = vadd.xlane.f32.xlu0 %v1756
    %v1758 = vpop.xlane.xlu0 %1757
    %v1759 = vsub.f32 %v1755, %v1758
    %v1760 = vrsqrt.pop %v1759
    %s1761 = scalar_lea.vmem [#allocation0], 24
    %v1762 = vld [vmem:[%s1761] sm:$0xff]
    %s1763 = scalar_lea.vmem [#allocation1], 24
    %v1764 = vld [vmem:[%s1763] sm:$0xff]
    %v1765 = vmul.f32 %v1764, %v1753
    %1766 = vadd.xlane.f32.xlu0 %v1765
    %v1767 = vpop.xlane.xlu0 %1766
    %v1768 = vsub.f32 %v1762, %v1767
    %v1769 = vmul.f32 %v1768, %v1760
    %vm1770 = vcmask 1047557
    %vm1771 = vmand %vm1751, %vm1770
    %v1772 = vsel %vm1771, %v1769, 0.0
    %v1773 = vadd.f32 %v1764, %v1772
    %s1774 = scalar_lea.vmem [#allocation1], 24
    %1775 = vst [vmem:[%s1774] sm:$0xff] %v1773
    %s1776 = scalar_lea.vmem [#allocation0], 32
    %v1777 = vld [vmem:[%s1776] sm:$0xff]
    %s1778 = scalar_lea.vmem [#allocation1], 32
    %v1779 = vld [vmem:[%s1778] sm:$0xff]
    %v1780 = vmul.f32 %v1779, %v1753
    %1781 = vadd.xlane.f32.xlu0 %v1780
    %v1782 = vpop.xlane.xlu0 %1781
    %v1783 = vsub.f32 %v1777, %v1782
    %v1784 = vmul.f32 %v1783, %v1760
    %v1785 = vsel %vm1751, %v1784, 0.0
    %v1786 = vadd.f32 %v1779, %v1785
    %s1787 = scalar_lea.vmem [#allocation1], 32
    %1788 = vst [vmem:[%s1787] sm:$0xff] %v1786
    %vm1789 = vcmask 253168
    %s1790 = scalar_lea.vmem [#allocation1], 30
    %v1791 = vld [vmem:[%s1790] ss:$0 sm:$0xff]
    %s1792 = scalar_lea.vmem [#allocation0], 30
    %v1793 = vld [vmem:[%s1792] ss:$0 sm:$0xff]
    %v1794 = vmul.f32 %v1791, %v1791
    %1795 = vadd.xlane.f32.xlu0 %v1794
    %v1796 = vpop.xlane.xlu0 %1795
    %v1797 = vsub.f32 %v1793, %v1796
    %v1798 = vrsqrt.pop %v1797
    %s1799 = scalar_lea.vmem [#allocation0], 24
    %v1800 = vld [vmem:[%s1799] sm:$0xff]
    %s1801 = scalar_lea.vmem [#allocation1], 24
    %v1802 = vld [vmem:[%s1801] sm:$0xff]
    %v1803 = vmul.f32 %v1802, %v1791
    %1804 = vadd.xlane.f32.xlu0 %v1803
    %v1805 = vpop.xlane.xlu0 %1804
    %v1806 = vsub.f32 %v1800, %v1805
    %v1807 = vmul.f32 %v1806, %v1798
    %vm1808 = vcmask 1047558
    %vm1809 = vmand %vm1789, %vm1808
    %v1810 = vsel %vm1809, %v1807, 0.0
    %v1811 = vadd.f32 %v1802, %v1810
    %s1812 = scalar_lea.vmem [#allocation1], 24
    %1813 = vst [vmem:[%s1812] sm:$0xff] %v1811
    %s1814 = scalar_lea.vmem [#allocation0], 32
    %v1815 = vld [vmem:[%s1814] sm:$0xff]
    %s1816 = scalar_lea.vmem [#allocation1], 32
    %v1817 = vld [vmem:[%s1816] sm:$0xff]
    %v1818 = vmul.f32 %v1817, %v1791
    %1819 = vadd.xlane.f32.xlu0 %v1818
    %v1820 = vpop.xlane.xlu0 %1819
    %v1821 = vsub.f32 %v1815, %v1820
    %v1822 = vmul.f32 %v1821, %v1798
    %v1823 = vsel %vm1789, %v1822, 0.0
    %v1824 = vadd.f32 %v1817, %v1823
    %s1825 = scalar_lea.vmem [#allocation1], 32
    %1826 = vst [vmem:[%s1825] sm:$0xff] %v1824
    %vm1827 = vcmask 261368
    %s1828 = scalar_lea.vmem [#allocation1], 31
    %v1829 = vld [vmem:[%s1828] ss:$0 sm:$0xff]
    %s1830 = scalar_lea.vmem [#allocation0], 31
    %v1831 = vld [vmem:[%s1830] ss:$0 sm:$0xff]
    %v1832 = vmul.f32 %v1829, %v1829
    %1833 = vadd.xlane.f32.xlu0 %v1832
    %v1834 = vpop.xlane.xlu0 %1833
    %v1835 = vsub.f32 %v1831, %v1834
    %v1836 = vrsqrt.pop %v1835
    %s1837 = scalar_lea.vmem [#allocation0], 24
    %v1838 = vld [vmem:[%s1837] sm:$0xff]
    %s1839 = scalar_lea.vmem [#allocation1], 24
    %v1840 = vld [vmem:[%s1839] sm:$0xff]
    %v1841 = vmul.f32 %v1840, %v1829
    %1842 = vadd.xlane.f32.xlu0 %v1841
    %v1843 = vpop.xlane.xlu0 %1842
    %v1844 = vsub.f32 %v1838, %v1843
    %v1845 = vmul.f32 %v1844, %v1836
    %vm1846 = vcmask 1047559
    %vm1847 = vmand %vm1827, %vm1846
    %v1848 = vsel %vm1847, %v1845, 0.0
    %v1849 = vadd.f32 %v1840, %v1848
    %s1850 = scalar_lea.vmem [#allocation1], 24
    %1851 = vst [vmem:[%s1850] sm:$0xff] %v1849
    %s1852 = scalar_lea.vmem [#allocation0], 32
    %v1853 = vld [vmem:[%s1852] sm:$0xff]
    %s1854 = scalar_lea.vmem [#allocation1], 32
    %v1855 = vld [vmem:[%s1854] sm:$0xff]
    %v1856 = vmul.f32 %v1855, %v1829
    %1857 = vadd.xlane.f32.xlu0 %v1856
    %v1858 = vpop.xlane.xlu0 %1857
    %v1859 = vsub.f32 %v1853, %v1858
    %v1860 = vmul.f32 %v1859, %v1836
    %v1861 = vsel %vm1827, %v1860, 0.0
    %v1862 = vadd.f32 %v1855, %v1861
    %s1863 = scalar_lea.vmem [#allocation1], 32
    %1864 = vst [vmem:[%s1863] sm:$0xff] %v1862
    %vm1865 = vcmask 269568
    %s1866 = scalar_lea.vmem [#allocation1], 32
    %v1867 = vld [vmem:[%s1866] ss:$0 sm:$0xff]
    %s1868 = scalar_lea.vmem [#allocation0], 32
    %v1869 = vld [vmem:[%s1868] ss:$0 sm:$0xff]
    %v1870 = vmul.f32 %v1867, %v1867
    %1871 = vadd.xlane.f32.xlu0 %v1870
    %v1872 = vpop.xlane.xlu0 %1871
    %v1873 = vsub.f32 %v1869, %v1872
    %v1874 = vrsqrt.pop %v1873
    %s1875 = scalar_lea.vmem [#allocation0], 32
    %v1876 = vld [vmem:[%s1875] sm:$0xff]
    %s1877 = scalar_lea.vmem [#allocation1], 32
    %v1878 = vld [vmem:[%s1877] sm:$0xff]
    %v1879 = vmul.f32 %v1878, %v1867
    %1880 = vadd.xlane.f32.xlu0 %v1879
    %v1881 = vpop.xlane.xlu0 %1880
    %v1882 = vsub.f32 %v1876, %v1881
    %v1883 = vmul.f32 %v1882, %v1874
    %v1884 = vsel %vm1865, %v1883, 0.0
    %v1885 = vadd.f32 %v1878, %v1884
    %s1886 = scalar_lea.vmem [#allocation1], 32
    %1887 = vst [vmem:[%s1886] sm:$0xff] %v1885
    %vm1888 = vcmask 277768
    %s1889 = scalar_lea.vmem [#allocation1], 33
    %v1890 = vld [vmem:[%s1889] ss:$0 sm:$0xff]
    %s1891 = scalar_lea.vmem [#allocation0], 33
    %v1892 = vld [vmem:[%s1891] ss:$0 sm:$0xff]
    %v1893 = vmul.f32 %v1890, %v1890
    %1894 = vadd.xlane.f32.xlu0 %v1893
    %v1895 = vpop.xlane.xlu0 %1894
    %v1896 = vsub.f32 %v1892, %v1895
    %v1897 = vrsqrt.pop %v1896
    %s1898 = scalar_lea.vmem [#allocation0], 32
    %v1899 = vld [vmem:[%s1898] sm:$0xff]
    %s1900 = scalar_lea.vmem [#allocation1], 32
    %v1901 = vld [vmem:[%s1900] sm:$0xff]
    %v1902 = vmul.f32 %v1901, %v1890
    %1903 = vadd.xlane.f32.xlu0 %v1902
    %v1904 = vpop.xlane.xlu0 %1903
    %v1905 = vsub.f32 %v1899, %v1904
    %v1906 = vmul.f32 %v1905, %v1897
    %vm1907 = vcmask 1047553
    %vm1908 = vmand %vm1888, %vm1907
    %v1909 = vsel %vm1908, %v1906, 0.0
    %v1910 = vadd.f32 %v1901, %v1909
    %s1911 = scalar_lea.vmem [#allocation1], 32
    %1912 = vst [vmem:[%s1911] sm:$0xff] %v1910
    %vm1913 = vcmask 285968
    %s1914 = scalar_lea.vmem [#allocation1], 34
    %v1915 = vld [vmem:[%s1914] ss:$0 sm:$0xff]
    %s1916 = scalar_lea.vmem [#allocation0], 34
    %v1917 = vld [vmem:[%s1916] ss:$0 sm:$0xff]
    %v1918 = vmul.f32 %v1915, %v1915
    %1919 = vadd.xlane.f32.xlu0 %v1918
    %v1920 = vpop.xlane.xlu0 %1919
    %v1921 = vsub.f32 %v1917, %v1920
    %v1922 = vrsqrt.pop %v1921
    %s1923 = scalar_lea.vmem [#allocation0], 32
    %v1924 = vld [vmem:[%s1923] sm:$0xff]
    %s1925 = scalar_lea.vmem [#allocation1], 32
    %v1926 = vld [vmem:[%s1925] sm:$0xff]
    %v1927 = vmul.f32 %v1926, %v1915
    %1928 = vadd.xlane.f32.xlu0 %v1927
    %v1929 = vpop.xlane.xlu0 %1928
    %v1930 = vsub.f32 %v1924, %v1929
    %v1931 = vmul.f32 %v1930, %v1922
    %vm1932 = vcmask 1047554
    %vm1933 = vmand %vm1913, %vm1932
    %v1934 = vsel %vm1933, %v1931, 0.0
    %v1935 = vadd.f32 %v1926, %v1934
    %s1936 = scalar_lea.vmem [#allocation1], 32
    %1937 = vst [vmem:[%s1936] sm:$0xff] %v1935
    %vm1938 = vcmask 294168
    %s1939 = scalar_lea.vmem [#allocation1], 35
    %v1940 = vld [vmem:[%s1939] ss:$0 sm:$0xff]
    %s1941 = scalar_lea.vmem [#allocation0], 35
    %v1942 = vld [vmem:[%s1941] ss:$0 sm:$0xff]
    %v1943 = vmul.f32 %v1940, %v1940
    %1944 = vadd.xlane.f32.xlu0 %v1943
    %v1945 = vpop.xlane.xlu0 %1944
    %v1946 = vsub.f32 %v1942, %v1945
    %v1947 = vrsqrt.pop %v1946
    %s1948 = scalar_lea.vmem [#allocation0], 32
    %v1949 = vld [vmem:[%s1948] sm:$0xff]
    %s1950 = scalar_lea.vmem [#allocation1], 32
    %v1951 = vld [vmem:[%s1950] sm:$0xff]
    %v1952 = vmul.f32 %v1951, %v1940
    %1953 = vadd.xlane.f32.xlu0 %v1952
    %v1954 = vpop.xlane.xlu0 %1953
    %v1955 = vsub.f32 %v1949, %v1954
    %v1956 = vmul.f32 %v1955, %v1947
    %vm1957 = vcmask 1047555
    %vm1958 = vmand %vm1938, %vm1957
    %v1959 = vsel %vm1958, %v1956, 0.0
    %v1960 = vadd.f32 %v1951, %v1959
    %s1961 = scalar_lea.vmem [#allocation1], 32
    %1962 = vst [vmem:[%s1961] sm:$0xff] %v1960
    // Predicated region
    $region36: #{custom-call.8} parent=1 // pred_check
      _
    $region37: #{custom-call.8} parent=1 // pred_check_branch
      %1964 = sbr.rel (0) target = $region39
    $region38: #{custom-call.8} parent=1 // pred_region
      // Predicated region
      $region40: #{custom-call.8} parent=38 // pred_check
        _
      $region41: #{custom-call.8} parent=38 // pred_check_branch
        %1966 = sbr.rel (0) target = $region43
      $region42: #{custom-call.8} parent=38 // pred_region
        // Predicated region
        $region55: #{custom-call.8} parent=42 // pred_check
          _
        $region56: #{custom-call.8} parent=42 // pred_check_branch
          %1989 = sbr.rel (0) target = $region58
        $region57: #{custom-call.8} parent=42 // pred_region
          loop: start=0, step=1, limit=1
          $region59: #{custom-call.8} parent=57 // loop_pre_header
            _
          $region60: #{custom-call.8} parent=57 // loop_header
            %s1991 = sphi 0, %s1995
            %p1992 = scmp.ge.s32.totalorder %s1991, 1
            %s1996 = sphi [#allocation1], [#allocation1]
            %s1997 = sphi %s1, %s1
          $region61: #{custom-call.8} parent=57 // loop_header_branch
            %1994 = sbr.rel (%p1992) target = $region65
          $region62: #{custom-call.8} parent=57 // loop_body
            %v1998 = vld [vmem:[%s1996] sm:$0xff]
            %1999 = vst [vmem:[%s1997] sm:$0xff] %v1998
            %v2000 = vld [vmem:[%s1996 + $0x8] sm:$0xff]
            %2001 = vst [vmem:[%s1997 + $0x8] sm:$0xff] %v2000
            %v2002 = vld [vmem:[%s1996 + $0x10] sm:$0xff]
            %2003 = vst [vmem:[%s1997 + $0x10] sm:$0xff] %v2002
            %v2004 = vld [vmem:[%s1996 + $0x18] sm:$0xff]
            %2005 = vst [vmem:[%s1997 + $0x18] sm:$0xff] %v2004
            %v2006 = vld [vmem:[%s1996 + $0x20] sm:$0xff]
            %2007 = vst [vmem:[%s1997 + $0x20] sm:$0xff] %v2006
          $region63: #{custom-call.8} parent=57 // loop_footer
            %s1995 = sadd.s32 1, %s1991
          $region64: #{custom-call.8} parent=57 // loop_footer_branch
            %1990 = sbr.rel target = $region60
          $region65: #{custom-call.8} parent=57 // loop_exit
            _
        $region58: #{custom-call.8} parent=42 // pred_fallthru
          _
        // Predicated region
        $region66: #{custom-call.8} parent=42 // pred_check
          _
        $region67: #{custom-call.8} parent=42 // pred_check_branch
          %2009 = sbr.rel target = $region69
        $region68: #{custom-call.8} parent=42 // pred_region
          _
        $region69: #{custom-call.8} parent=42 // pred_fallthru
          _
      $region43: #{custom-call.8} parent=38 // pred_fallthru
        _
      // Predicated region
      $region44: #{custom-call.8} parent=38 // pred_check
        _
      $region45: #{custom-call.8} parent=38 // pred_check_branch
        %1968 = sbr.rel target = $region47
      $region46: #{custom-call.8} parent=38 // pred_region
        loop: start=0, step=1, limit=1
        $region48: #{custom-call.8} parent=46 // loop_pre_header
          _
        $region49: #{custom-call.8} parent=46 // loop_header
          %s1971 = sphi 0, %s1975
          %p1972 = scmp.ge.s32.totalorder %s1971, 1
          %s1976 = sphi [#allocation1], [#allocation1]
          %s1977 = sphi %s1, %s1
        $region50: #{custom-call.8} parent=46 // loop_header_branch
          %1974 = sbr.rel (%p1972) target = $region54
        $region51: #{custom-call.8} parent=46 // loop_body
          %v1978 = vld [vmem:[%s1976] sm:$0xff]
          %1979 = vst [vmem:[%s1977] sm:$0xff] %v1978
          %v1980 = vld [vmem:[%s1976 + $0x8] sm:$0xff]
          %1981 = vst [vmem:[%s1977 + $0x8] sm:$0xff] %v1980
          %v1982 = vld [vmem:[%s1976 + $0x10] sm:$0xff]
          %1983 = vst [vmem:[%s1977 + $0x10] sm:$0xff] %v1982
          %v1984 = vld [vmem:[%s1976 + $0x18] sm:$0xff]
          %1985 = vst [vmem:[%s1977 + $0x18] sm:$0xff] %v1984
          %v1986 = vld [vmem:[%s1976 + $0x20] sm:$0xff]
          %1987 = vst [vmem:[%s1977 + $0x20] sm:$0xff] %v1986
        $region52: #{custom-call.8} parent=46 // loop_footer
          %s1975 = sadd.s32 1, %s1971
        $region53: #{custom-call.8} parent=46 // loop_footer_branch
          %1970 = sbr.rel target = $region49
        $region54: #{custom-call.8} parent=46 // loop_exit
          _
      $region47: #{custom-call.8} parent=38 // pred_fallthru
        _
    $region39: #{custom-call.8} parent=1 // pred_fallthru
      _
    %2010 = vnop

// kernel: custom-call.9
$region0: #{custom-call.9}
  %s0 = inlined_call_operand.vmem [shape: f32[1,36,36], index: 0, kind: input, shape index: {}]
  %s1 = inlined_call_operand.vmem [shape: f32[1,36,36], index: 1, kind: output, shape index: {}]
  $region1: #{custom-call.9} parent=0
    #allocation0 [shape = 'u8[20480]{0}', space=vmem, size = 0x5000, scoped, tag = 'operand span for operand 0']
    #allocation1 [shape = 'u8[20480]{0}', space=vmem, size = 0x5000, scoped, tag = 'operand span for operand 1']
    #allocation2 [shape = 'f32[36,36]{1,0}', space=vmem, size = 0x5000, scoped, tag = 'rescaled input a']
    // Predicated region
    $region2: #{custom-call.9} parent=1 // pred_check
      _
    $region3: #{custom-call.9} parent=1 // pred_check_branch
      %3 = sbr.rel (0) target = $region5
    $region4: #{custom-call.9} parent=1 // pred_region
      // Predicated region
      $region6: #{custom-call.9} parent=4 // pred_check
        _
      $region7: #{custom-call.9} parent=4 // pred_check_branch
        %5 = sbr.rel (0) target = $region9
      $region8: #{custom-call.9} parent=4 // pred_region
        // Predicated region
        $region21: #{custom-call.9} parent=8 // pred_check
          _
        $region22: #{custom-call.9} parent=8 // pred_check_branch
          %28 = sbr.rel (0) target = $region24
        $region23: #{custom-call.9} parent=8 // pred_region
          loop: start=0, step=1, limit=1
          $region25: #{custom-call.9} parent=23 // loop_pre_header
            _
          $region26: #{custom-call.9} parent=23 // loop_header
            %s30 = sphi 0, %s34
            %p31 = scmp.ge.s32.totalorder %s30, 1
            %s35 = sphi %s0, %s0
            %s36 = sphi [#allocation0], [#allocation0]
          $region27: #{custom-call.9} parent=23 // loop_header_branch
            %33 = sbr.rel (%p31) target = $region31
          $region28: #{custom-call.9} parent=23 // loop_body
            %v37 = vld [vmem:[%s35] sm:$0xff]
            %38 = vst [vmem:[%s36] sm:$0xff] %v37
            %v39 = vld [vmem:[%s35 + $0x8] sm:$0xff]
            %40 = vst [vmem:[%s36 + $0x8] sm:$0xff] %v39
            %v41 = vld [vmem:[%s35 + $0x10] sm:$0xff]
            %42 = vst [vmem:[%s36 + $0x10] sm:$0xff] %v41
            %v43 = vld [vmem:[%s35 + $0x18] sm:$0xff]
            %44 = vst [vmem:[%s36 + $0x18] sm:$0xff] %v43
            %v45 = vld [vmem:[%s35 + $0x20] sm:$0xff]
            %46 = vst [vmem:[%s36 + $0x20] sm:$0xff] %v45
          $region29: #{custom-call.9} parent=23 // loop_footer
            %s34 = sadd.s32 1, %s30
          $region30: #{custom-call.9} parent=23 // loop_footer_branch
            %29 = sbr.rel target = $region26
          $region31: #{custom-call.9} parent=23 // loop_exit
            _
        $region24: #{custom-call.9} parent=8 // pred_fallthru
          _
        // Predicated region
        $region32: #{custom-call.9} parent=8 // pred_check
          _
        $region33: #{custom-call.9} parent=8 // pred_check_branch
          %48 = sbr.rel target = $region35
        $region34: #{custom-call.9} parent=8 // pred_region
          _
        $region35: #{custom-call.9} parent=8 // pred_fallthru
          _
      $region9: #{custom-call.9} parent=4 // pred_fallthru
        _
      // Predicated region
      $region10: #{custom-call.9} parent=4 // pred_check
        _
      $region11: #{custom-call.9} parent=4 // pred_check_branch
        %7 = sbr.rel target = $region13
      $region12: #{custom-call.9} parent=4 // pred_region
        loop: start=0, step=1, limit=1
        $region14: #{custom-call.9} parent=12 // loop_pre_header
          _
        $region15: #{custom-call.9} parent=12 // loop_header
          %s10 = sphi 0, %s14
          %p11 = scmp.ge.s32.totalorder %s10, 1
          %s15 = sphi %s0, %s0
          %s16 = sphi [#allocation0], [#allocation0]
        $region16: #{custom-call.9} parent=12 // loop_header_branch
          %13 = sbr.rel (%p11) target = $region20
        $region17: #{custom-call.9} parent=12 // loop_body
          %v17 = vld [vmem:[%s15] sm:$0xff]
          %18 = vst [vmem:[%s16] sm:$0xff] %v17
          %v19 = vld [vmem:[%s15 + $0x8] sm:$0xff]
          %20 = vst [vmem:[%s16 + $0x8] sm:$0xff] %v19
          %v21 = vld [vmem:[%s15 + $0x10] sm:$0xff]
          %22 = vst [vmem:[%s16 + $0x10] sm:$0xff] %v21
          %v23 = vld [vmem:[%s15 + $0x18] sm:$0xff]
          %24 = vst [vmem:[%s16 + $0x18] sm:$0xff] %v23
          %v25 = vld [vmem:[%s15 + $0x20] sm:$0xff]
          %26 = vst [vmem:[%s16 + $0x20] sm:$0xff] %v25
        $region18: #{custom-call.9} parent=12 // loop_footer
          %s14 = sadd.s32 1, %s10
        $region19: #{custom-call.9} parent=12 // loop_footer_branch
          %9 = sbr.rel target = $region15
        $region20: #{custom-call.9} parent=12 // loop_exit
          _
      $region13: #{custom-call.9} parent=4 // pred_fallthru
        _
    $region5: #{custom-call.9} parent=1 // pred_fallthru
      _
    %49 = vnop
    %v50 = vlaneseq
    %v51 = vand.u32 %v50, 127
    %vm52 = vcmp.lt.s32.totalorder %v51, 36
    %v53 = vlaneseq
    %v54 = vshrl.u32 %v53, 7
    %vm56 = vcmp.eq.s32.totalorder %v54, %v51
    %v57 = vld [vmem:[#allocation0] sm:$0xff]
    %v58 = vsel %vm56, %v57, 0.0
    %59 = vadd.xlane.f32.xlu0 %v58
    %v60 = vpop.xlane.xlu0 %59
    %vm61 = vcmp.ge.s32.totalorder %v54, %v51
    %vm62 = vmand %vm61, %vm52
    %v63 = vsel %vm62, %v57, 0.0
    %v64 = vrcp.pop %v60
    %v65 = vmul.f32 %v63, %v64
    %66 = vst [vmem:[#allocation2] sm:$0xff] %v65
    %s67 = scalar_lea.vmem [#allocation0], 8
    %s68 = scalar_lea.vmem [#allocation2], 8
    %v69 = vlaneseq
    %v70 = vshrl.u32 %v69, 7
    %v71 = vadd.s32 %v70, 8
    %vm72 = vcmp.eq.s32.totalorder %v71, %v51
    %v73 = vld [vmem:[%s67] sm:$0xff]
    %v74 = vsel %vm72, %v73, 0.0
    %75 = vadd.xlane.f32.xlu0 %v74
    %v76 = vpop.xlane.xlu0 %75
    %vm77 = vcmp.ge.s32.totalorder %v71, %v51
    %vm78 = vmand %vm77, %vm52
    %v79 = vsel %vm78, %v73, 0.0
    %v80 = vrcp.pop %v76
    %v81 = vmul.f32 %v79, %v80
    %82 = vst [vmem:[%s68] sm:$0xff] %v81
    %s83 = scalar_lea.vmem [#allocation0], 16
    %s84 = scalar_lea.vmem [#allocation2], 16
    %v85 = vlaneseq
    %v86 = vshrl.u32 %v85, 7
    %v87 = vadd.s32 %v86, 16
    %vm88 = vcmp.eq.s32.totalorder %v87, %v51
    %v89 = vld [vmem:[%s83] sm:$0xff]
    %v90 = vsel %vm88, %v89, 0.0
    %91 = vadd.xlane.f32.xlu0 %v90
    %v92 = vpop.xlane.xlu0 %91
    %vm93 = vcmp.ge.s32.totalorder %v87, %v51
    %vm94 = vmand %vm93, %vm52
    %v95 = vsel %vm94, %v89, 0.0
    %v96 = vrcp.pop %v92
    %v97 = vmul.f32 %v95, %v96
    %98 = vst [vmem:[%s84] sm:$0xff] %v97
    %s99 = scalar_lea.vmem [#allocation0], 24
    %s100 = scalar_lea.vmem [#allocation2], 24
    %v101 = vlaneseq
    %v102 = vshrl.u32 %v101, 7
    %v103 = vadd.s32 %v102, 24
    %vm104 = vcmp.eq.s32.totalorder %v103, %v51
    %v105 = vld [vmem:[%s99] sm:$0xff]
    %v106 = vsel %vm104, %v105, 0.0
    %107 = vadd.xlane.f32.xlu0 %v106
    %v108 = vpop.xlane.xlu0 %107
    %vm109 = vcmp.ge.s32.totalorder %v103, %v51
    %vm110 = vmand %vm109, %vm52
    %v111 = vsel %vm110, %v105, 0.0
    %v112 = vrcp.pop %v108
    %v113 = vmul.f32 %v111, %v112
    %114 = vst [vmem:[%s100] sm:$0xff] %v113
    %s115 = scalar_lea.vmem [#allocation0], 32
    %s116 = scalar_lea.vmem [#allocation2], 32
    %v117 = vlaneseq
    %v118 = vshrl.u32 %v117, 7
    %v119 = vadd.s32 %v118, 32
    %vm120 = vcmp.eq.s32.totalorder %v119, %v51
    %v121 = vld [vmem:[%s115] sm:$0xff]
    %v122 = vsel %vm120, %v121, 0.0
    %123 = vadd.xlane.f32.xlu0 %v122
    %v124 = vpop.xlane.xlu0 %123
    %vm125 = vcmp.ge.s32.totalorder %v119, %v51
    %vm126 = vmand %vm125, %vm52
    %v127 = vsel %vm126, %v121, 0.0
    %v128 = vrcp.pop %v124
    %v129 = vmul.f32 %v127, %v128
    %130 = vst [vmem:[%s116] sm:$0xff] %v129
    %v131 = vlaneseq
    %v132 = vand.u32 %v131, 127
    %v133 = vlaneseq
    %v134 = vshrl.u32 %v133, 7
    %vm136 = vcmp.eq.s32.totalorder %v132, %v134
    %v137 = vlaneseq
    %v138 = vand.u32 %v137, 127
    %vm139 = vcmp.eq.s32.totalorder %v138, 0
    %v140 = vsel %vm139, 1.0, -1.0
    %v141 = vsel %vm136, %v140, 0.0
    %v142 = vlaneseq
    %v143 = vand.u32 %v142, 127
    %v144 = vlaneseq
    %v145 = vshrl.u32 %v144, 7
    %v146 = vadd.s32 %v145, 8
    %vm147 = vcmp.eq.s32.totalorder %v143, %v146
    %v148 = vsel %vm147, -1.0, 0.0
    %v149 = vlaneseq
    %v150 = vand.u32 %v149, 127
    %v151 = vlaneseq
    %v152 = vshrl.u32 %v151, 7
    %v153 = vadd.s32 %v152, 16
    %vm154 = vcmp.eq.s32.totalorder %v150, %v153
    %v155 = vsel %vm154, -1.0, 0.0
    %v156 = vlaneseq
    %v157 = vand.u32 %v156, 127
    %v158 = vlaneseq
    %v159 = vshrl.u32 %v158, 7
    %v160 = vadd.s32 %v159, 24
    %vm161 = vcmp.eq.s32.totalorder %v157, %v160
    %v162 = vsel %vm161, -1.0, 0.0
    %v163 = vlaneseq
    %v164 = vand.u32 %v163, 127
    %v165 = vlaneseq
    %v166 = vshrl.u32 %v165, 7
    %v167 = vadd.s32 %v166, 32
    %vm168 = vcmp.eq.s32.totalorder %v164, %v167
    %v169 = vsel %vm168, -1.0, 0.0
    %s170 = scalar_lea.vmem [#allocation2], 1
    %v171 = vld [vmem:[%s170] ss:$0 sm:$0xff]
    %v172 = vxor.u32 %v171, 2147483648
    %v173 = vlaneseq
    %v174 = vand.u32 %v173, 127
    %vm175 = vcmp.eq.s32.totalorder %v174, 1
    %v176 = vmul.f32 %v172, %v141
    %177 = vadd.xlane.f32.xlu0 %v176
    %v178 = vpop.xlane.xlu0 %177
    %v179 = vsel %vm175, %v178, %v141
    %s180 = scalar_lea.vmem [#allocation2], 2
    %v181 = vld [vmem:[%s180] ss:$0 sm:$0xff]
    %v182 = vxor.u32 %v181, 2147483648
    %v183 = vlaneseq
    %v184 = vand.u32 %v183, 127
    %vm185 = vcmp.eq.s32.totalorder %v184, 2
    %v186 = vmul.f32 %v182, %v179
    %187 = vadd.xlane.f32.xlu0 %v186
    %v188 = vpop.xlane.xlu0 %187
    %v189 = vsel %vm185, %v188, %v179
    %s190 = scalar_lea.vmem [#allocation2], 3
    %v191 = vld [vmem:[%s190] ss:$0 sm:$0xff]
    %v192 = vxor.u32 %v191, 2147483648
    %v193 = vlaneseq
    %v194 = vand.u32 %v193, 127
    %vm195 = vcmp.eq.s32.totalorder %v194, 3
    %v196 = vmul.f32 %v192, %v189
    %197 = vadd.xlane.f32.xlu0 %v196
    %v198 = vpop.xlane.xlu0 %197
    %v199 = vsel %vm195, %v198, %v189
    %s200 = scalar_lea.vmem [#allocation2], 4
    %v201 = vld [vmem:[%s200] ss:$0 sm:$0xff]
    %v202 = vxor.u32 %v201, 2147483648
    %v203 = vlaneseq
    %v204 = vand.u32 %v203, 127
    %vm205 = vcmp.eq.s32.totalorder %v204, 4
    %v206 = vmul.f32 %v202, %v199
    %207 = vadd.xlane.f32.xlu0 %v206
    %v208 = vpop.xlane.xlu0 %207
    %v209 = vsel %vm205, %v208, %v199
    %s210 = scalar_lea.vmem [#allocation2], 5
    %v211 = vld [vmem:[%s210] ss:$0 sm:$0xff]
    %v212 = vxor.u32 %v211, 2147483648
    %v213 = vlaneseq
    %v214 = vand.u32 %v213, 127
    %vm215 = vcmp.eq.s32.totalorder %v214, 5
    %v216 = vmul.f32 %v212, %v209
    %217 = vadd.xlane.f32.xlu0 %v216
    %v218 = vpop.xlane.xlu0 %217
    %v219 = vsel %vm215, %v218, %v209
    %s220 = scalar_lea.vmem [#allocation2], 6
    %v221 = vld [vmem:[%s220] ss:$0 sm:$0xff]
    %v222 = vxor.u32 %v221, 2147483648
    %v223 = vlaneseq
    %v224 = vand.u32 %v223, 127
    %vm225 = vcmp.eq.s32.totalorder %v224, 6
    %v226 = vmul.f32 %v222, %v219
    %227 = vadd.xlane.f32.xlu0 %v226
    %v228 = vpop.xlane.xlu0 %227
    %v229 = vsel %vm225, %v228, %v219
    %s230 = scalar_lea.vmem [#allocation2], 7
    %v231 = vld [vmem:[%s230] ss:$0 sm:$0xff]
    %v232 = vxor.u32 %v231, 2147483648
    %v233 = vlaneseq
    %v234 = vand.u32 %v233, 127
    %vm235 = vcmp.eq.s32.totalorder %v234, 7
    %v236 = vmul.f32 %v232, %v229
    %237 = vadd.xlane.f32.xlu0 %v236
    %v238 = vpop.xlane.xlu0 %237
    %v239 = vsel %vm235, %v238, %v229
    %s240 = scalar_lea.vmem [#allocation2], 8
    %v241 = vld [vmem:[%s240] ss:$0 sm:$0xff]
    %v242 = vxor.u32 %v241, 2147483648
    %v243 = vlaneseq
    %v244 = vand.u32 %v243, 127
    %vm245 = vcmp.eq.s32.totalorder %v244, 8
    %v246 = vmul.f32 %v242, %v239
    %247 = vadd.xlane.f32.xlu0 %v246
    %v248 = vpop.xlane.xlu0 %247
    %v249 = vsel %vm245, %v248, %v239
    %v250 = vmul.f32 %v242, %v148
    %251 = vadd.xlane.f32.xlu0 %v250
    %v252 = vpop.xlane.xlu0 %251
    %v253 = vsel %vm245, %v252, %v148
    %s254 = scalar_lea.vmem [#allocation2], 9
    %v255 = vld [vmem:[%s254] ss:$0 sm:$0xff]
    %v256 = vxor.u32 %v255, 2147483648
    %v257 = vlaneseq
    %v258 = vand.u32 %v257, 127
    %vm259 = vcmp.eq.s32.totalorder %v258, 9
    %v260 = vmul.f32 %v256, %v249
    %261 = vadd.xlane.f32.xlu0 %v260
    %v262 = vpop.xlane.xlu0 %261
    %v263 = vsel %vm259, %v262, %v249
    %v264 = vmul.f32 %v256, %v253
    %265 = vadd.xlane.f32.xlu0 %v264
    %v266 = vpop.xlane.xlu0 %265
    %v267 = vsel %vm259, %v266, %v253
    %s268 = scalar_lea.vmem [#allocation2], 10
    %v269 = vld [vmem:[%s268] ss:$0 sm:$0xff]
    %v270 = vxor.u32 %v269, 2147483648
    %v271 = vlaneseq
    %v272 = vand.u32 %v271, 127
    %vm273 = vcmp.eq.s32.totalorder %v272, 10
    %v274 = vmul.f32 %v270, %v263
    %275 = vadd.xlane.f32.xlu0 %v274
    %v276 = vpop.xlane.xlu0 %275
    %v277 = vsel %vm273, %v276, %v263
    %v278 = vmul.f32 %v270, %v267
    %279 = vadd.xlane.f32.xlu0 %v278
    %v280 = vpop.xlane.xlu0 %279
    %v281 = vsel %vm273, %v280, %v267
    %s282 = scalar_lea.vmem [#allocation2], 11
    %v283 = vld [vmem:[%s282] ss:$0 sm:$0xff]
    %v284 = vxor.u32 %v283, 2147483648
    %v285 = vlaneseq
    %v286 = vand.u32 %v285, 127
    %vm287 = vcmp.eq.s32.totalorder %v286, 11
    %v288 = vmul.f32 %v284, %v277
    %289 = vadd.xlane.f32.xlu0 %v288
    %v290 = vpop.xlane.xlu0 %289
    %v291 = vsel %vm287, %v290, %v277
    %v292 = vmul.f32 %v284, %v281
    %293 = vadd.xlane.f32.xlu0 %v292
    %v294 = vpop.xlane.xlu0 %293
    %v295 = vsel %vm287, %v294, %v281
    %s296 = scalar_lea.vmem [#allocation2], 12
    %v297 = vld [vmem:[%s296] ss:$0 sm:$0xff]
    %v298 = vxor.u32 %v297, 2147483648
    %v299 = vlaneseq
    %v300 = vand.u32 %v299, 127
    %vm301 = vcmp.eq.s32.totalorder %v300, 12
    %v302 = vmul.f32 %v298, %v291
    %303 = vadd.xlane.f32.xlu0 %v302
    %v304 = vpop.xlane.xlu0 %303
    %v305 = vsel %vm301, %v304, %v291
    %v306 = vmul.f32 %v298, %v295
    %307 = vadd.xlane.f32.xlu0 %v306
    %v308 = vpop.xlane.xlu0 %307
    %v309 = vsel %vm301, %v308, %v295
    %s310 = scalar_lea.vmem [#allocation2], 13
    %v311 = vld [vmem:[%s310] ss:$0 sm:$0xff]
    %v312 = vxor.u32 %v311, 2147483648
    %v313 = vlaneseq
    %v314 = vand.u32 %v313, 127
    %vm315 = vcmp.eq.s32.totalorder %v314, 13
    %v316 = vmul.f32 %v312, %v305
    %317 = vadd.xlane.f32.xlu0 %v316
    %v318 = vpop.xlane.xlu0 %317
    %v319 = vsel %vm315, %v318, %v305
    %v320 = vmul.f32 %v312, %v309
    %321 = vadd.xlane.f32.xlu0 %v320
    %v322 = vpop.xlane.xlu0 %321
    %v323 = vsel %vm315, %v322, %v309
    %s324 = scalar_lea.vmem [#allocation2], 14
    %v325 = vld [vmem:[%s324] ss:$0 sm:$0xff]
    %v326 = vxor.u32 %v325, 2147483648
    %v327 = vlaneseq
    %v328 = vand.u32 %v327, 127
    %vm329 = vcmp.eq.s32.totalorder %v328, 14
    %v330 = vmul.f32 %v326, %v319
    %331 = vadd.xlane.f32.xlu0 %v330
    %v332 = vpop.xlane.xlu0 %331
    %v333 = vsel %vm329, %v332, %v319
    %v334 = vmul.f32 %v326, %v323
    %335 = vadd.xlane.f32.xlu0 %v334
    %v336 = vpop.xlane.xlu0 %335
    %v337 = vsel %vm329, %v336, %v323
    %s338 = scalar_lea.vmem [#allocation2], 15
    %v339 = vld [vmem:[%s338] ss:$0 sm:$0xff]
    %v340 = vxor.u32 %v339, 2147483648
    %v341 = vlaneseq
    %v342 = vand.u32 %v341, 127
    %vm343 = vcmp.eq.s32.totalorder %v342, 15
    %v344 = vmul.f32 %v340, %v333
    %345 = vadd.xlane.f32.xlu0 %v344
    %v346 = vpop.xlane.xlu0 %345
    %v347 = vsel %vm343, %v346, %v333
    %v348 = vmul.f32 %v340, %v337
    %349 = vadd.xlane.f32.xlu0 %v348
    %v350 = vpop.xlane.xlu0 %349
    %v351 = vsel %vm343, %v350, %v337
    %s352 = scalar_lea.vmem [#allocation2], 16
    %v353 = vld [vmem:[%s352] ss:$0 sm:$0xff]
    %v354 = vxor.u32 %v353, 2147483648
    %v355 = vlaneseq
    %v356 = vand.u32 %v355, 127
    %vm357 = vcmp.eq.s32.totalorder %v356, 16
    %v358 = vmul.f32 %v354, %v347
    %359 = vadd.xlane.f32.xlu0 %v358
    %v360 = vpop.xlane.xlu0 %359
    %v361 = vsel %vm357, %v360, %v347
    %v362 = vmul.f32 %v354, %v351
    %363 = vadd.xlane.f32.xlu0 %v362
    %v364 = vpop.xlane.xlu0 %363
    %v365 = vsel %vm357, %v364, %v351
    %v366 = vmul.f32 %v354, %v155
    %367 = vadd.xlane.f32.xlu0 %v366
    %v368 = vpop.xlane.xlu0 %367
    %v369 = vsel %vm357, %v368, %v155
    %s370 = scalar_lea.vmem [#allocation2], 17
    %v371 = vld [vmem:[%s370] ss:$0 sm:$0xff]
    %v372 = vxor.u32 %v371, 2147483648
    %v373 = vlaneseq
    %v374 = vand.u32 %v373, 127
    %vm375 = vcmp.eq.s32.totalorder %v374, 17
    %v376 = vmul.f32 %v372, %v361
    %377 = vadd.xlane.f32.xlu0 %v376
    %v378 = vpop.xlane.xlu0 %377
    %v379 = vsel %vm375, %v378, %v361
    %v380 = vmul.f32 %v372, %v365
    %381 = vadd.xlane.f32.xlu0 %v380
    %v382 = vpop.xlane.xlu0 %381
    %v383 = vsel %vm375, %v382, %v365
    %v384 = vmul.f32 %v372, %v369
    %385 = vadd.xlane.f32.xlu0 %v384
    %v386 = vpop.xlane.xlu0 %385
    %v387 = vsel %vm375, %v386, %v369
    %s388 = scalar_lea.vmem [#allocation2], 18
    %v389 = vld [vmem:[%s388] ss:$0 sm:$0xff]
    %v390 = vxor.u32 %v389, 2147483648
    %v391 = vlaneseq
    %v392 = vand.u32 %v391, 127
    %vm393 = vcmp.eq.s32.totalorder %v392, 18
    %v394 = vmul.f32 %v390, %v379
    %395 = vadd.xlane.f32.xlu0 %v394
    %v396 = vpop.xlane.xlu0 %395
    %v397 = vsel %vm393, %v396, %v379
    %v398 = vmul.f32 %v390, %v383
    %399 = vadd.xlane.f32.xlu0 %v398
    %v400 = vpop.xlane.xlu0 %399
    %v401 = vsel %vm393, %v400, %v383
    %v402 = vmul.f32 %v390, %v387
    %403 = vadd.xlane.f32.xlu0 %v402
    %v404 = vpop.xlane.xlu0 %403
    %v405 = vsel %vm393, %v404, %v387
    %s406 = scalar_lea.vmem [#allocation2], 19
    %v407 = vld [vmem:[%s406] ss:$0 sm:$0xff]
    %v408 = vxor.u32 %v407, 2147483648
    %v409 = vlaneseq
    %v410 = vand.u32 %v409, 127
    %vm411 = vcmp.eq.s32.totalorder %v410, 19
    %v412 = vmul.f32 %v408, %v397
    %413 = vadd.xlane.f32.xlu0 %v412
    %v414 = vpop.xlane.xlu0 %413
    %v415 = vsel %vm411, %v414, %v397
    %v416 = vmul.f32 %v408, %v401
    %417 = vadd.xlane.f32.xlu0 %v416
    %v418 = vpop.xlane.xlu0 %417
    %v419 = vsel %vm411, %v418, %v401
    %v420 = vmul.f32 %v408, %v405
    %421 = vadd.xlane.f32.xlu0 %v420
    %v422 = vpop.xlane.xlu0 %421
    %v423 = vsel %vm411, %v422, %v405
    %s424 = scalar_lea.vmem [#allocation2], 20
    %v425 = vld [vmem:[%s424] ss:$0 sm:$0xff]
    %v426 = vxor.u32 %v425, 2147483648
    %v427 = vlaneseq
    %v428 = vand.u32 %v427, 127
    %vm429 = vcmp.eq.s32.totalorder %v428, 20
    %v430 = vmul.f32 %v426, %v415
    %431 = vadd.xlane.f32.xlu0 %v430
    %v432 = vpop.xlane.xlu0 %431
    %v433 = vsel %vm429, %v432, %v415
    %v434 = vmul.f32 %v426, %v419
    %435 = vadd.xlane.f32.xlu0 %v434
    %v436 = vpop.xlane.xlu0 %435
    %v437 = vsel %vm429, %v436, %v419
    %v438 = vmul.f32 %v426, %v423
    %439 = vadd.xlane.f32.xlu0 %v438
    %v440 = vpop.xlane.xlu0 %439
    %v441 = vsel %vm429, %v440, %v423
    %s442 = scalar_lea.vmem [#allocation2], 21
    %v443 = vld [vmem:[%s442] ss:$0 sm:$0xff]
    %v444 = vxor.u32 %v443, 2147483648
    %v445 = vlaneseq
    %v446 = vand.u32 %v445, 127
    %vm447 = vcmp.eq.s32.totalorder %v446, 21
    %v448 = vmul.f32 %v444, %v433
    %449 = vadd.xlane.f32.xlu0 %v448
    %v450 = vpop.xlane.xlu0 %449
    %v451 = vsel %vm447, %v450, %v433
    %v452 = vmul.f32 %v444, %v437
    %453 = vadd.xlane.f32.xlu0 %v452
    %v454 = vpop.xlane.xlu0 %453
    %v455 = vsel %vm447, %v454, %v437
    %v456 = vmul.f32 %v444, %v441
    %457 = vadd.xlane.f32.xlu0 %v456
    %v458 = vpop.xlane.xlu0 %457
    %v459 = vsel %vm447, %v458, %v441
    %s460 = scalar_lea.vmem [#allocation2], 22
    %v461 = vld [vmem:[%s460] ss:$0 sm:$0xff]
    %v462 = vxor.u32 %v461, 2147483648
    %v463 = vlaneseq
    %v464 = vand.u32 %v463, 127
    %vm465 = vcmp.eq.s32.totalorder %v464, 22
    %v466 = vmul.f32 %v462, %v451
    %467 = vadd.xlane.f32.xlu0 %v466
    %v468 = vpop.xlane.xlu0 %467
    %v469 = vsel %vm465, %v468, %v451
    %v470 = vmul.f32 %v462, %v455
    %471 = vadd.xlane.f32.xlu0 %v470
    %v472 = vpop.xlane.xlu0 %471
    %v473 = vsel %vm465, %v472, %v455
    %v474 = vmul.f32 %v462, %v459
    %475 = vadd.xlane.f32.xlu0 %v474
    %v476 = vpop.xlane.xlu0 %475
    %v477 = vsel %vm465, %v476, %v459
    %s478 = scalar_lea.vmem [#allocation2], 23
    %v479 = vld [vmem:[%s478] ss:$0 sm:$0xff]
    %v480 = vxor.u32 %v479, 2147483648
    %v481 = vlaneseq
    %v482 = vand.u32 %v481, 127
    %vm483 = vcmp.eq.s32.totalorder %v482, 23
    %v484 = vmul.f32 %v480, %v469
    %485 = vadd.xlane.f32.xlu0 %v484
    %v486 = vpop.xlane.xlu0 %485
    %v487 = vsel %vm483, %v486, %v469
    %v488 = vmul.f32 %v480, %v473
    %489 = vadd.xlane.f32.xlu0 %v488
    %v490 = vpop.xlane.xlu0 %489
    %v491 = vsel %vm483, %v490, %v473
    %v492 = vmul.f32 %v480, %v477
    %493 = vadd.xlane.f32.xlu0 %v492
    %v494 = vpop.xlane.xlu0 %493
    %v495 = vsel %vm483, %v494, %v477
    %s496 = scalar_lea.vmem [#allocation2], 24
    %v497 = vld [vmem:[%s496] ss:$0 sm:$0xff]
    %v498 = vxor.u32 %v497, 2147483648
    %v499 = vlaneseq
    %v500 = vand.u32 %v499, 127
    %vm501 = vcmp.eq.s32.totalorder %v500, 24
    %v502 = vmul.f32 %v498, %v487
    %503 = vadd.xlane.f32.xlu0 %v502
    %v504 = vpop.xlane.xlu0 %503
    %v505 = vsel %vm501, %v504, %v487
    %v506 = vmul.f32 %v498, %v491
    %507 = vadd.xlane.f32.xlu0 %v506
    %v508 = vpop.xlane.xlu0 %507
    %v509 = vsel %vm501, %v508, %v491
    %v510 = vmul.f32 %v498, %v495
    %511 = vadd.xlane.f32.xlu0 %v510
    %v512 = vpop.xlane.xlu0 %511
    %v513 = vsel %vm501, %v512, %v495
    %v514 = vmul.f32 %v498, %v162
    %515 = vadd.xlane.f32.xlu0 %v514
    %v516 = vpop.xlane.xlu0 %515
    %v517 = vsel %vm501, %v516, %v162
    %s518 = scalar_lea.vmem [#allocation2], 25
    %v519 = vld [vmem:[%s518] ss:$0 sm:$0xff]
    %v520 = vxor.u32 %v519, 2147483648
    %v521 = vlaneseq
    %v522 = vand.u32 %v521, 127
    %vm523 = vcmp.eq.s32.totalorder %v522, 25
    %v524 = vmul.f32 %v520, %v505
    %525 = vadd.xlane.f32.xlu0 %v524
    %v526 = vpop.xlane.xlu0 %525
    %v527 = vsel %vm523, %v526, %v505
    %v528 = vmul.f32 %v520, %v509
    %529 = vadd.xlane.f32.xlu0 %v528
    %v530 = vpop.xlane.xlu0 %529
    %v531 = vsel %vm523, %v530, %v509
    %v532 = vmul.f32 %v520, %v513
    %533 = vadd.xlane.f32.xlu0 %v532
    %v534 = vpop.xlane.xlu0 %533
    %v535 = vsel %vm523, %v534, %v513
    %v536 = vmul.f32 %v520, %v517
    %537 = vadd.xlane.f32.xlu0 %v536
    %v538 = vpop.xlane.xlu0 %537
    %v539 = vsel %vm523, %v538, %v517
    %s540 = scalar_lea.vmem [#allocation2], 26
    %v541 = vld [vmem:[%s540] ss:$0 sm:$0xff]
    %v542 = vxor.u32 %v541, 2147483648
    %v543 = vlaneseq
    %v544 = vand.u32 %v543, 127
    %vm545 = vcmp.eq.s32.totalorder %v544, 26
    %v546 = vmul.f32 %v542, %v527
    %547 = vadd.xlane.f32.xlu0 %v546
    %v548 = vpop.xlane.xlu0 %547
    %v549 = vsel %vm545, %v548, %v527
    %v550 = vmul.f32 %v542, %v531
    %551 = vadd.xlane.f32.xlu0 %v550
    %v552 = vpop.xlane.xlu0 %551
    %v553 = vsel %vm545, %v552, %v531
    %v554 = vmul.f32 %v542, %v535
    %555 = vadd.xlane.f32.xlu0 %v554
    %v556 = vpop.xlane.xlu0 %555
    %v557 = vsel %vm545, %v556, %v535
    %v558 = vmul.f32 %v542, %v539
    %559 = vadd.xlane.f32.xlu0 %v558
    %v560 = vpop.xlane.xlu0 %559
    %v561 = vsel %vm545, %v560, %v539
    %s562 = scalar_lea.vmem [#allocation2], 27
    %v563 = vld [vmem:[%s562] ss:$0 sm:$0xff]
    %v564 = vxor.u32 %v563, 2147483648
    %v565 = vlaneseq
    %v566 = vand.u32 %v565, 127
    %vm567 = vcmp.eq.s32.totalorder %v566, 27
    %v568 = vmul.f32 %v564, %v549
    %569 = vadd.xlane.f32.xlu0 %v568
    %v570 = vpop.xlane.xlu0 %569
    %v571 = vsel %vm567, %v570, %v549
    %v572 = vmul.f32 %v564, %v553
    %573 = vadd.xlane.f32.xlu0 %v572
    %v574 = vpop.xlane.xlu0 %573
    %v575 = vsel %vm567, %v574, %v553
    %v576 = vmul.f32 %v564, %v557
    %577 = vadd.xlane.f32.xlu0 %v576
    %v578 = vpop.xlane.xlu0 %577
    %v579 = vsel %vm567, %v578, %v557
    %v580 = vmul.f32 %v564, %v561
    %581 = vadd.xlane.f32.xlu0 %v580
    %v582 = vpop.xlane.xlu0 %581
    %v583 = vsel %vm567, %v582, %v561
    %s584 = scalar_lea.vmem [#allocation2], 28
    %v585 = vld [vmem:[%s584] ss:$0 sm:$0xff]
    %v586 = vxor.u32 %v585, 2147483648
    %v587 = vlaneseq
    %v588 = vand.u32 %v587, 127
    %vm589 = vcmp.eq.s32.totalorder %v588, 28
    %v590 = vmul.f32 %v586, %v571
    %591 = vadd.xlane.f32.xlu0 %v590
    %v592 = vpop.xlane.xlu0 %591
    %v593 = vsel %vm589, %v592, %v571
    %v594 = vmul.f32 %v586, %v575
    %595 = vadd.xlane.f32.xlu0 %v594
    %v596 = vpop.xlane.xlu0 %595
    %v597 = vsel %vm589, %v596, %v575
    %v598 = vmul.f32 %v586, %v579
    %599 = vadd.xlane.f32.xlu0 %v598
    %v600 = vpop.xlane.xlu0 %599
    %v601 = vsel %vm589, %v600, %v579
    %v602 = vmul.f32 %v586, %v583
    %603 = vadd.xlane.f32.xlu0 %v602
    %v604 = vpop.xlane.xlu0 %603
    %v605 = vsel %vm589, %v604, %v583
    %s606 = scalar_lea.vmem [#allocation2], 29
    %v607 = vld [vmem:[%s606] ss:$0 sm:$0xff]
    %v608 = vxor.u32 %v607, 2147483648
    %v609 = vlaneseq
    %v610 = vand.u32 %v609, 127
    %vm611 = vcmp.eq.s32.totalorder %v610, 29
    %v612 = vmul.f32 %v608, %v593
    %613 = vadd.xlane.f32.xlu0 %v612
    %v614 = vpop.xlane.xlu0 %613
    %v615 = vsel %vm611, %v614, %v593
    %v616 = vmul.f32 %v608, %v597
    %617 = vadd.xlane.f32.xlu0 %v616
    %v618 = vpop.xlane.xlu0 %617
    %v619 = vsel %vm611, %v618, %v597
    %v620 = vmul.f32 %v608, %v601
    %621 = vadd.xlane.f32.xlu0 %v620
    %v622 = vpop.xlane.xlu0 %621
    %v623 = vsel %vm611, %v622, %v601
    %v624 = vmul.f32 %v608, %v605
    %625 = vadd.xlane.f32.xlu0 %v624
    %v626 = vpop.xlane.xlu0 %625
    %v627 = vsel %vm611, %v626, %v605
    %s628 = scalar_lea.vmem [#allocation2], 30
    %v629 = vld [vmem:[%s628] ss:$0 sm:$0xff]
    %v630 = vxor.u32 %v629, 2147483648
    %v631 = vlaneseq
    %v632 = vand.u32 %v631, 127
    %vm633 = vcmp.eq.s32.totalorder %v632, 30
    %v634 = vmul.f32 %v630, %v615
    %635 = vadd.xlane.f32.xlu0 %v634
    %v636 = vpop.xlane.xlu0 %635
    %v637 = vsel %vm633, %v636, %v615
    %v638 = vmul.f32 %v630, %v619
    %639 = vadd.xlane.f32.xlu0 %v638
    %v640 = vpop.xlane.xlu0 %639
    %v641 = vsel %vm633, %v640, %v619
    %v642 = vmul.f32 %v630, %v623
    %643 = vadd.xlane.f32.xlu0 %v642
    %v644 = vpop.xlane.xlu0 %643
    %v645 = vsel %vm633, %v644, %v623
    %v646 = vmul.f32 %v630, %v627
    %647 = vadd.xlane.f32.xlu0 %v646
    %v648 = vpop.xlane.xlu0 %647
    %v649 = vsel %vm633, %v648, %v627
    %s650 = scalar_lea.vmem [#allocation2], 31
    %v651 = vld [vmem:[%s650] ss:$0 sm:$0xff]
    %v652 = vxor.u32 %v651, 2147483648
    %v653 = vlaneseq
    %v654 = vand.u32 %v653, 127
    %vm655 = vcmp.eq.s32.totalorder %v654, 31
    %v656 = vmul.f32 %v652, %v637
    %657 = vadd.xlane.f32.xlu0 %v656
    %v658 = vpop.xlane.xlu0 %657
    %v659 = vsel %vm655, %v658, %v637
    %v660 = vmul.f32 %v652, %v641
    %661 = vadd.xlane.f32.xlu0 %v660
    %v662 = vpop.xlane.xlu0 %661
    %v663 = vsel %vm655, %v662, %v641
    %v664 = vmul.f32 %v652, %v645
    %665 = vadd.xlane.f32.xlu0 %v664
    %v666 = vpop.xlane.xlu0 %665
    %v667 = vsel %vm655, %v666, %v645
    %v668 = vmul.f32 %v652, %v649
    %669 = vadd.xlane.f32.xlu0 %v668
    %v670 = vpop.xlane.xlu0 %669
    %v671 = vsel %vm655, %v670, %v649
    %s672 = scalar_lea.vmem [#allocation2], 32
    %v673 = vld [vmem:[%s672] ss:$0 sm:$0xff]
    %v674 = vxor.u32 %v673, 2147483648
    %v675 = vlaneseq
    %v676 = vand.u32 %v675, 127
    %vm677 = vcmp.eq.s32.totalorder %v676, 32
    %v678 = vmul.f32 %v674, %v659
    %679 = vadd.xlane.f32.xlu0 %v678
    %v680 = vpop.xlane.xlu0 %679
    %v681 = vsel %vm677, %v680, %v659
    %v682 = vmul.f32 %v674, %v663
    %683 = vadd.xlane.f32.xlu0 %v682
    %v684 = vpop.xlane.xlu0 %683
    %v685 = vsel %vm677, %v684, %v663
    %v686 = vmul.f32 %v674, %v667
    %687 = vadd.xlane.f32.xlu0 %v686
    %v688 = vpop.xlane.xlu0 %687
    %v689 = vsel %vm677, %v688, %v667
    %v690 = vmul.f32 %v674, %v671
    %691 = vadd.xlane.f32.xlu0 %v690
    %v692 = vpop.xlane.xlu0 %691
    %v693 = vsel %vm677, %v692, %v671
    %v694 = vmul.f32 %v674, %v169
    %695 = vadd.xlane.f32.xlu0 %v694
    %v696 = vpop.xlane.xlu0 %695
    %v697 = vsel %vm677, %v696, %v169
    %s698 = scalar_lea.vmem [#allocation2], 33
    %v699 = vld [vmem:[%s698] ss:$0 sm:$0xff]
    %v700 = vxor.u32 %v699, 2147483648
    %v701 = vlaneseq
    %v702 = vand.u32 %v701, 127
    %vm703 = vcmp.eq.s32.totalorder %v702, 33
    %v704 = vmul.f32 %v700, %v681
    %705 = vadd.xlane.f32.xlu0 %v704
    %v706 = vpop.xlane.xlu0 %705
    %v707 = vsel %vm703, %v706, %v681
    %v708 = vmul.f32 %v700, %v685
    %709 = vadd.xlane.f32.xlu0 %v708
    %v710 = vpop.xlane.xlu0 %709
    %v711 = vsel %vm703, %v710, %v685
    %v712 = vmul.f32 %v700, %v689
    %713 = vadd.xlane.f32.xlu0 %v712
    %v714 = vpop.xlane.xlu0 %713
    %v715 = vsel %vm703, %v714, %v689
    %v716 = vmul.f32 %v700, %v693
    %717 = vadd.xlane.f32.xlu0 %v716
    %v718 = vpop.xlane.xlu0 %717
    %v719 = vsel %vm703, %v718, %v693
    %v720 = vmul.f32 %v700, %v697
    %721 = vadd.xlane.f32.xlu0 %v720
    %v722 = vpop.xlane.xlu0 %721
    %v723 = vsel %vm703, %v722, %v697
    %s724 = scalar_lea.vmem [#allocation2], 34
    %v725 = vld [vmem:[%s724] ss:$0 sm:$0xff]
    %v726 = vxor.u32 %v725, 2147483648
    %v727 = vlaneseq
    %v728 = vand.u32 %v727, 127
    %vm729 = vcmp.eq.s32.totalorder %v728, 34
    %v730 = vmul.f32 %v726, %v707
    %731 = vadd.xlane.f32.xlu0 %v730
    %v732 = vpop.xlane.xlu0 %731
    %v733 = vsel %vm729, %v732, %v707
    %v734 = vmul.f32 %v726, %v711
    %735 = vadd.xlane.f32.xlu0 %v734
    %v736 = vpop.xlane.xlu0 %735
    %v737 = vsel %vm729, %v736, %v711
    %v738 = vmul.f32 %v726, %v715
    %739 = vadd.xlane.f32.xlu0 %v738
    %v740 = vpop.xlane.xlu0 %739
    %v741 = vsel %vm729, %v740, %v715
    %v742 = vmul.f32 %v726, %v719
    %743 = vadd.xlane.f32.xlu0 %v742
    %v744 = vpop.xlane.xlu0 %743
    %v745 = vsel %vm729, %v744, %v719
    %v746 = vmul.f32 %v726, %v723
    %747 = vadd.xlane.f32.xlu0 %v746
    %v748 = vpop.xlane.xlu0 %747
    %v749 = vsel %vm729, %v748, %v723
    %s750 = scalar_lea.vmem [#allocation2], 35
    %v751 = vld [vmem:[%s750] ss:$0 sm:$0xff]
    %v752 = vxor.u32 %v751, 2147483648
    %v753 = vlaneseq
    %v754 = vand.u32 %v753, 127
    %vm755 = vcmp.eq.s32.totalorder %v754, 35
    %v756 = vmul.f32 %v752, %v733
    %757 = vadd.xlane.f32.xlu0 %v756
    %v758 = vpop.xlane.xlu0 %757
    %v759 = vsel %vm755, %v758, %v733
    %v760 = vmul.f32 %v752, %v737
    %761 = vadd.xlane.f32.xlu0 %v760
    %v762 = vpop.xlane.xlu0 %761
    %v763 = vsel %vm755, %v762, %v737
    %v764 = vmul.f32 %v752, %v741
    %765 = vadd.xlane.f32.xlu0 %v764
    %v766 = vpop.xlane.xlu0 %765
    %v767 = vsel %vm755, %v766, %v741
    %v768 = vmul.f32 %v752, %v745
    %769 = vadd.xlane.f32.xlu0 %v768
    %v770 = vpop.xlane.xlu0 %769
    %v771 = vsel %vm755, %v770, %v745
    %v772 = vmul.f32 %v752, %v749
    %773 = vadd.xlane.f32.xlu0 %v772
    %v774 = vpop.xlane.xlu0 %773
    %v775 = vsel %vm755, %v774, %v749
    %v776 = vrcp.pop %v60
    %v777 = vmul.f32 %v759, %v776
    %vm778 = vweird.f32 %v60
    %v779 = vsel %vm778, %v759, %v777
    %780 = vst [vmem:[#allocation1] sm:$0xff] %v779
    %v781 = vrcp.pop %v76
    %v782 = vmul.f32 %v763, %v781
    %vm783 = vweird.f32 %v76
    %v784 = vsel %vm783, %v763, %v782
    %s785 = scalar_lea.vmem [#allocation1], 8
    %786 = vst [vmem:[%s785] sm:$0xff] %v784
    %v787 = vrcp.pop %v92
    %v788 = vmul.f32 %v767, %v787
    %vm789 = vweird.f32 %v92
    %v790 = vsel %vm789, %v767, %v788
    %s791 = scalar_lea.vmem [#allocation1], 16
    %792 = vst [vmem:[%s791] sm:$0xff] %v790
    %v793 = vrcp.pop %v108
    %v794 = vmul.f32 %v771, %v793
    %vm795 = vweird.f32 %v108
    %v796 = vsel %vm795, %v771, %v794
    %s797 = scalar_lea.vmem [#allocation1], 24
    %798 = vst [vmem:[%s797] sm:$0xff] %v796
    %v799 = vrcp.pop %v124
    %v800 = vmul.f32 %v775, %v799
    %vm801 = vweird.f32 %v124
    %v802 = vsel %vm801, %v775, %v800
    %s803 = scalar_lea.vmem [#allocation1], 32
    %804 = vst [vmem:[%s803] sm:$0xff] %v802
    // Predicated region
    $region36: #{custom-call.9} parent=1 // pred_check
      _
    $region37: #{custom-call.9} parent=1 // pred_check_branch
      %806 = sbr.rel (0) target = $region39
    $region38: #{custom-call.9} parent=1 // pred_region
      // Predicated region
      $region40: #{custom-call.9} parent=38 // pred_check
        _
      $region41: #{custom-call.9} parent=38 // pred_check_branch
        %808 = sbr.rel (0) target = $region43
      $region42: #{custom-call.9} parent=38 // pred_region
        // Predicated region
        $region55: #{custom-call.9} parent=42 // pred_check
          _
        $region56: #{custom-call.9} parent=42 // pred_check_branch
          %831 = sbr.rel (0) target = $region58
        $region57: #{custom-call.9} parent=42 // pred_region
          loop: start=0, step=1, limit=1
          $region59: #{custom-call.9} parent=57 // loop_pre_header
            _
          $region60: #{custom-call.9} parent=57 // loop_header
            %s833 = sphi 0, %s837
            %p834 = scmp.ge.s32.totalorder %s833, 1
            %s838 = sphi [#allocation1], [#allocation1]
            %s839 = sphi %s1, %s1
          $region61: #{custom-call.9} parent=57 // loop_header_branch
            %836 = sbr.rel (%p834) target = $region65
          $region62: #{custom-call.9} parent=57 // loop_body
            %v840 = vld [vmem:[%s838] sm:$0xff]
            %841 = vst [vmem:[%s839] sm:$0xff] %v840
            %v842 = vld [vmem:[%s838 + $0x8] sm:$0xff]
            %843 = vst [vmem:[%s839 + $0x8] sm:$0xff] %v842
            %v844 = vld [vmem:[%s838 + $0x10] sm:$0xff]
            %845 = vst [vmem:[%s839 + $0x10] sm:$0xff] %v844
            %v846 = vld [vmem:[%s838 + $0x18] sm:$0xff]
            %847 = vst [vmem:[%s839 + $0x18] sm:$0xff] %v846
            %v848 = vld [vmem:[%s838 + $0x20] sm:$0xff]
            %849 = vst [vmem:[%s839 + $0x20] sm:$0xff] %v848
          $region63: #{custom-call.9} parent=57 // loop_footer
            %s837 = sadd.s32 1, %s833
          $region64: #{custom-call.9} parent=57 // loop_footer_branch
            %832 = sbr.rel target = $region60
          $region65: #{custom-call.9} parent=57 // loop_exit
            _
        $region58: #{custom-call.9} parent=42 // pred_fallthru
          _
        // Predicated region
        $region66: #{custom-call.9} parent=42 // pred_check
          _
        $region67: #{custom-call.9} parent=42 // pred_check_branch
          %851 = sbr.rel target = $region69
        $region68: #{custom-call.9} parent=42 // pred_region
          _
        $region69: #{custom-call.9} parent=42 // pred_fallthru
          _
      $region43: #{custom-call.9} parent=38 // pred_fallthru
        _
      // Predicated region
      $region44: #{custom-call.9} parent=38 // pred_check
        _
      $region45: #{custom-call.9} parent=38 // pred_check_branch
        %810 = sbr.rel target = $region47
      $region46: #{custom-call.9} parent=38 // pred_region
        loop: start=0, step=1, limit=1
        $region48: #{custom-call.9} parent=46 // loop_pre_header
          _
        $region49: #{custom-call.9} parent=46 // loop_header
          %s813 = sphi 0, %s817
          %p814 = scmp.ge.s32.totalorder %s813, 1
          %s818 = sphi [#allocation1], [#allocation1]
          %s819 = sphi %s1, %s1
        $region50: #{custom-call.9} parent=46 // loop_header_branch
          %816 = sbr.rel (%p814) target = $region54
        $region51: #{custom-call.9} parent=46 // loop_body
          %v820 = vld [vmem:[%s818] sm:$0xff]
          %821 = vst [vmem:[%s819] sm:$0xff] %v820
          %v822 = vld [vmem:[%s818 + $0x8] sm:$0xff]
          %823 = vst [vmem:[%s819 + $0x8] sm:$0xff] %v822
          %v824 = vld [vmem:[%s818 + $0x10] sm:$0xff]
          %825 = vst [vmem:[%s819 + $0x10] sm:$0xff] %v824
          %v826 = vld [vmem:[%s818 + $0x18] sm:$0xff]
          %827 = vst [vmem:[%s819 + $0x18] sm:$0xff] %v826
          %v828 = vld [vmem:[%s818 + $0x20] sm:$0xff]
          %829 = vst [vmem:[%s819 + $0x20] sm:$0xff] %v828
        $region52: #{custom-call.9} parent=46 // loop_footer
          %s817 = sadd.s32 1, %s813
        $region53: #{custom-call.9} parent=46 // loop_footer_branch
          %812 = sbr.rel target = $region49
        $region54: #{custom-call.9} parent=46 // loop_exit
          _
      $region47: #{custom-call.9} parent=38 // pred_fallthru
        _
    $region39: #{custom-call.9} parent=1 // pred_fallthru
      _
    %852 = vnop

// kernel: li_conv2d_weights_forward.1
$region0: #{li_conv2d_weights_forward.1}
  #allocation0 [shape = 'u32[]', space=smem, size = 0x4, offset = 0x4, fixed_abs, tag = 'smem constant byte address 0x4 - core index']
  #allocation1 [shape = 'u32[144,128]{1,0:T(1,128)}', space=vmem, size = 0x12000, scoped, tag = 'internal scratch']
  %s0 = inlined_call_operand.vmem [shape: f32[36,36], index: 0, kind: input, shape index: {}]
  %s1 = inlined_call_operand.vmem [shape: f32[1,36], index: 1, kind: input, shape index: {}]
  %s2 = inlined_call_operand.vmem [shape: f32[36,128], index: 2, kind: input, shape index: {}]
  %s3 = inlined_call_operand.vmem [shape: f32[36,128], index: 3, kind: output, shape index: {}]
  %s4 = sld [smem:[#allocation0]]
  $region22: #{li_conv2d_weights_forward.1} parent=0
    _
  %s6 = ssub.s32 1, %s4
  %s7 = scalar_select 0, %s6, %s4
  // Predicated region
  $region2: #{li_conv2d_weights_forward.1} parent=0 // pred_check
    _
  $region3: #{li_conv2d_weights_forward.1} parent=0 // pred_check_branch
    %9 = sbr.rel (0) target = $region5
  $region4: #{li_conv2d_weights_forward.1} parent=0 // pred_region
    _
  $region5: #{li_conv2d_weights_forward.1} parent=0 // pred_fallthru
    _
  // Predicated region
  $region6: #{li_conv2d_weights_forward.1} parent=0 // pred_check
    _
  $region7: #{li_conv2d_weights_forward.1} parent=0 // pred_check_branch
    %11 = sbr.rel (0) target = $region9
  $region8: #{li_conv2d_weights_forward.1} parent=0 // pred_region
    _
  $region9: #{li_conv2d_weights_forward.1} parent=0 // pred_fallthru
    _
  // Predicated region
  $region10: #{li_conv2d_weights_forward.1} parent=0 // pred_check
    _
  $region11: #{li_conv2d_weights_forward.1} parent=0 // pred_check_branch
    %13 = sbr.rel (0) target = $region13
  $region12: #{li_conv2d_weights_forward.1} parent=0 // pred_region
    _
  $region13: #{li_conv2d_weights_forward.1} parent=0 // pred_fallthru
    _
  %v14 = vld [vmem:[%s0] sm:$0xff]
  %v15 = vld [vmem:[%s0 + $0x8] sm:$0xff]
  %v16 = vld [vmem:[%s0 + $0x10] sm:$0xff]
  %v17 = vld [vmem:[%s0 + $0x18] sm:$0xff]
  %v18 = vld [vmem:[%s0 + $0x20] sm:$0xf]
  %v19 = vld [vmem:[%s1] sm:$0x1]
  %v20 = vmul.f32 %v19, 1.442695
  %v21 = vpow.pop %v20
  %v23 = vlaneseq
  %v24 = vshrl.u32 %v23, 7
  %v25 = vsub.s32 0, %v24
  %v26 = vrot.slane %v21, %v25
  %v28 = vmul.f32 %v14, %v26
  %v29 = vmul.f32 %v15, %v26
  %v30 = vmul.f32 %v16, %v26
  %v31 = vmul.f32 %v17, %v26
  %v32 = vmul.f32 %v18, %v26
  %v33 = vld [vmem:[%s2] sm:$0xff]
  %v34 = vld [vmem:[%s2 + $0x8] sm:$0xff]
  %v35 = vld [vmem:[%s2 + $0x10] sm:$0xff]
  %v36 = vld [vmem:[%s2 + $0x18] sm:$0xff]
  %v37 = vld [vmem:[%s2 + $0x20] sm:$0xf]
  %vm38 = vcmask 293888
  %v40 = vsel %vm38, %v28, 0
  %v43 = vsel %vm38, %v29, 0
  %v46 = vsel %vm38, %v30, 0
  %v49 = vsel %vm38, %v31, 0
  %v52 = vsel %vm38, %v32, 0
  %vm54 = vcmask 1043456
  %v56 = vsel %vm54, %v37, 0
  %58 = vmatprep.subr.mxu0 0.0
  %59 = vmatpush1.msra.mxu0 %v33
  %60 = vmatprep.subr.mxu0 0.0
  %61 = vmatpush1.msra.mxu0 %v34
  %62 = vmatprep.subr.mxu0 0.0
  %63 = vmatpush1.msra.mxu0 %v35
  %64 = vmatprep.subr.mxu0 0.0
  %65 = vmatpush1.msra.mxu0 %v36
  %66 = vmatprep.subr.mxu0 0.0
  %67 = vmatpush1.msra.mxu0 %v56
  %68 = vmatprep.subr.mxu0 0.0
  %69 = vmatpush1.msra.mxu0 0.0
  %70 = vmatprep.subr.mxu0 0.0
  %71 = vmatpush1.msra.mxu0 0.0
  %72 = vmatprep.subr.mxu0 0.0
  %73 = vmatpush1.msra.mxu0 0.0
  %74 = vmatprep.subr.mxu0 0.0
  %75 = vmatpush1.msra.mxu0 0.0
  %76 = vmatprep.subr.mxu0 0.0
  %77 = vmatpush1.msra.mxu0 0.0
  %78 = vmatprep.subr.mxu0 0.0
  %79 = vmatpush1.msra.mxu0 0.0
  %80 = vmatprep.subr.mxu0 0.0
  %81 = vmatpush1.msra.mxu0 0.0
  %82 = vmatprep.subr.mxu0 0.0
  %83 = vmatpush1.msra.mxu0 0.0
  %84 = vmatprep.subr.mxu0 0.0
  %85 = vmatpush1.msra.mxu0 0.0
  %86 = vmatprep.subr.mxu0 0.0
  %87 = vmatpush1.msra.mxu0 0.0
  %88 = vmatprep.subr.mxu0 0.0
  %89 = vmatpush1.msra.mxu0 0.0
  %90 = vmatprep.subr.mxu0 0.0
  %91 = vmatpush1.msra.mxu0 0.0
  %92 = vmatprep.subr.mxu0 0.0
  %93 = vmatpush1.msra.mxu0 0.0
  %94 = vmatprep.subr.mxu0 0.0
  %95 = vmatpush1.msra.mxu0 0.0
  %96 = vmatprep.subr.mxu0 0.0
  %97 = vmatpush1.msra.mxu0 0.0
  %98 = vmatprep.subr.mxu0 0.0
  %99 = vmatpush1.msra.mxu0 0.0
  %100 = vmatprep.subr.mxu0 0.0
  %101 = vmatpush1.msra.mxu0 0.0
  %102 = vmatprep.subr.mxu0 0.0
  %103 = vmatpush1.msra.mxu0 0.0
  %104 = vmatprep.subr.mxu0 0.0
  %105 = vmatpush1.msra.mxu0 0.0
  %106 = vmatprep.subr.mxu0 0.0
  %107 = vmatpush1.msra.mxu0 0.0
  %108 = vmatprep.subr.mxu0 0.0
  %109 = vmatpush1.msra.mxu0 0.0
  %110 = vmatprep.subr.mxu0 0.0
  %111 = vmatpush1.msra.mxu0 0.0
  %112 = vmatprep.subr.mxu0 0.0
  %113 = vmatpush1.msra.mxu0 0.0
  %114 = vmatprep.subr.mxu0 0.0
  %115 = vmatpush1.msra.mxu0 0.0
  %116 = vmatprep.subr.mxu0 0.0
  %117 = vmatpush1.msra.mxu0 0.0
  %118 = vmatprep.subr.mxu0 0.0
  %119 = vmatpush1.msra.mxu0 0.0
  %120 = vmatprep.subr.mxu0 0.0
  %121 = vmatpush1.msra.mxu0 0.0
  %122 = vmatprep.mubr.f32.mxu0 0.0
  %123 = vmatmul.mubr.f32.gmra.mrb[0].mxu0 %v40
  %v124 = vpop.f32.mrb[0].mxu0
  %v125 = vadd.f32 0.0, %v124
  %v126 = vpop.f32.mrb[0].mxu0
  %127 = vmatprep.mubr.f32.mxu0 0.0
  %128 = vmatmul.mubr.f32.gmra.mrb[0].mxu0 %v43
  %v129 = vpop.f32.mrb[0].mxu0
  %v130 = vadd.f32 0.0, %v129
  %v131 = vpop.f32.mrb[0].mxu0
  %132 = vmatprep.mubr.f32.mxu0 0.0
  %133 = vmatmul.mubr.f32.gmra.mrb[0].mxu0 %v46
  %v134 = vpop.f32.mrb[0].mxu0
  %v135 = vadd.f32 0.0, %v134
  %v136 = vpop.f32.mrb[0].mxu0
  %137 = vmatprep.mubr.f32.mxu0 0.0
  %138 = vmatmul.mubr.f32.gmra.mrb[0].mxu0 %v49
  %v139 = vpop.f32.mrb[0].mxu0
  %v140 = vadd.f32 0.0, %v139
  %v141 = vpop.f32.mrb[0].mxu0
  %142 = vmatprep.mubr.f32.mxu0 0.0
  %143 = vmatmul.mubr.f32.gmra.mrb[0].mxu0 %v52
  %v144 = vpop.f32.mrb[0].mxu0
  %v145 = vadd.f32 0.0, %v144
  %v146 = vpop.f32.mrb[0].mxu0
  %147 = vdwg.mxu0
  %v148 = vlaneseq
  %v149 = vshrl.u32 %v148, 7
  %v150 = vadd.s32 %v149, 8
  %v151 = vadd.s32 %v149, 16
  %v152 = vadd.s32 %v149, 24
  %v153 = vadd.s32 %v149, 32
  %v154 = vlaneseq
  %v155 = vand.u32 %v154, 127
  %vm156 = vcmp.eq.s32.totalorder %v149, %v155
  %vm157 = vcmp.eq.s32.totalorder %v150, %v155
  %vm158 = vcmp.eq.s32.totalorder %v151, %v155
  %vm159 = vcmp.eq.s32.totalorder %v152, %v155
  %vm160 = vcmp.eq.s32.totalorder %v153, %v155
  %vm161 = vcmp.lt.s32.totalorder %v155, 36
  %vm162 = vmand %vm156, %vm161
  %vm163 = vmand %vm157, %vm161
  %vm164 = vmand %vm158, %vm161
  %vm165 = vmand %vm159, %vm161
  %vm166 = vmand %vm160, %vm161
  %v167 = vadd.f32 %v125, 36.0
  %v168 = vadd.f32 %v130, 36.0
  %v169 = vadd.f32 %v135, 36.0
  %v170 = vadd.f32 %v140, 36.0
  %v171 = vadd.f32 %v145, 36.0
  %v172 = vsel %vm162, %v167, %v125
  %v173 = vsel %vm163, %v168, %v130
  %v174 = vsel %vm164, %v169, %v135
  %v175 = vsel %vm165, %v170, %v140
  %v176 = vsel %vm166, %v171, %v145
  %177 = vst [vmem:[%s3] sm:$0xff] %v172
  %178 = vst [vmem:[%s3 + $0x8] sm:$0xff] %v173
  %179 = vst [vmem:[%s3 + $0x10] sm:$0xff] %v174
  %180 = vst [vmem:[%s3 + $0x18] sm:$0xff] %v175
  %181 = vst [vmem:[%s3 + $0x20] sm:$0xf] %v176
  // Predicated region
  $region14: #{li_conv2d_weights_forward.1} parent=0 // pred_check
    _
  $region15: #{li_conv2d_weights_forward.1} parent=0 // pred_check_branch
    %183 = sbr.rel (0) target = $region17
  $region16: #{li_conv2d_weights_forward.1} parent=0 // pred_region
    _
  $region17: #{li_conv2d_weights_forward.1} parent=0 // pred_fallthru
    _
  // Predicated region
  $region18: #{li_conv2d_weights_forward.1} parent=0 // pred_check
    _
  $region19: #{li_conv2d_weights_forward.1} parent=0 // pred_check_branch
    %185 = sbr.rel (0) target = $region21
  $region20: #{li_conv2d_weights_forward.1} parent=0 // pred_region
    _
  $region21: #{li_conv2d_weights_forward.1} parent=0 // pred_fallthru
    _

</llo_original>
